<compile_context>
chip_gen: v7x
topology: tpu7x:2x2x1
jax: 0.10.0
libtpu: 0.0.40
codegen_flags: <defaults>
</compile_context>

<pallas_src>
import functools

import jax
import jax.numpy as jnp
from jax import lax
from jax.experimental import pallas as pl
from jax.experimental.pallas import tpu as pltpu

N_BITS = 8
N_LEVELS = 2 ** N_BITS
EPS = 1e-8

# Scoped-VMEM ceiling; per-step tiles here are at most a few MiB so this is
# safe on v7x (64 MiB physical) and leaves headroom on v5e/v6e (128 MiB).
VMEM_LIMIT_BYTES = 64 * 1024 * 1024


def _round_up(x, m):
    return (x + m - 1) // m * m


def _quant_params(x_min, x_max):
    """'max' scale scheme: delta, zero_point, 1/(delta+eps) as a (3,) f32."""
    x_min = jnp.minimum(x_min, 0.0)
    x_max = jnp.maximum(x_max, 0.0)
    delta = jnp.maximum((x_max - x_min) / (N_LEVELS - 1), 1e-8)
    zero_point = jnp.round(-x_min / delta)
    inv_delta = 1.0 / (delta + EPS)
    return jnp.stack([delta, zero_point, inv_delta]).astype(jnp.float32)


# --------------------- weight quantizer: tiled min/max -----------------------

def _minmax_partials(w2d, tn=128):
    """Per-column-tile min/max partials of a (K, Npad) f32 weight matrix."""
    K, Npad = w2d.shape
    nw = Npad // tn

    def kernel(w_ref, mn_ref, mx_ref):
        w = w_ref[...]
        mn = jnp.min(w, axis=(0, 1), keepdims=True)
        mx = jnp.max(w, axis=(0, 1), keepdims=True)
        mn_ref[...] = jnp.broadcast_to(mn, (8, 128))
        mx_ref[...] = jnp.broadcast_to(mx, (8, 128))

    return pl.pallas_call(
        kernel,
        out_shape=(jax.ShapeDtypeStruct((nw * 8, 128), jnp.float32),
                   jax.ShapeDtypeStruct((nw * 8, 128), jnp.float32)),
        grid=(nw,),
        in_specs=[pl.BlockSpec((K, tn), lambda j: (0, j))],
        out_specs=(pl.BlockSpec((8, 128), lambda j: (j, 0)),
                   pl.BlockSpec((8, 128), lambda j: (j, 0))),
        compiler_params=pltpu.CompilerParams(
            dimension_semantics=("parallel",),
            vmem_limit_bytes=VMEM_LIMIT_BYTES,
        ),
    )(w2d)


# --------------------- weight quantizer: tiled quant-dequant -----------------

def _weight_qdq(w2d, scal, tn=128):
    """Tiled UniformAffineQuantizer QDQ of the (K, Npad) weight -> bf16."""
    K, Npad = w2d.shape
    nw = Npad // tn

    def kernel(s_ref, w_ref, o_ref):
        delta = s_ref[0]
        zero_point = s_ref[1]
        inv_delta = s_ref[2]
        w = w_ref[...]
        x_int = jnp.round(w * inv_delta) + zero_point
        x_q = jnp.clip(x_int, 0.0, float(N_LEVELS - 1))
        o_ref[...] = ((x_q - zero_point) * delta).astype(o_ref.dtype)

    return pl.pallas_call(
        kernel,
        out_shape=jax.ShapeDtypeStruct((K, Npad), jnp.bfloat16),
        grid_spec=pltpu.PrefetchScalarGridSpec(
            num_scalar_prefetch=1,
            grid=(nw,),
            in_specs=[pl.BlockSpec((K, tn), lambda j, s: (0, j))],
            out_specs=pl.BlockSpec((K, tn), lambda j, s: (0, j)),
        ),
        compiler_params=pltpu.CompilerParams(
            dimension_semantics=("parallel",),
            vmem_limit_bytes=VMEM_LIMIT_BYTES,
        ),
    )(scal, w2d)


# ------------- conv-as-matmul + bias + fused activation min/max --------------

def _matmul_bias_minmax(a, w, bias_row, *, M, Cout, tm, tn):
    """y[m, n] = sum_k a[m, k] * w[k, n] + bias[n], in bf16 out, plus masked
    per-tile min/max partials of the biased f32 result (activation-quantizer
    statistics fused into the matmul epilogue)."""
    Mpad, K = a.shape
    _, Npad = w.shape
    nm, nn = Mpad // tm, Npad // tn

    def kernel(a_ref, w_ref, b_ref, y_ref, mn_ref, mx_ref):
        acc = jnp.dot(a_ref[...], w_ref[...],
                      preferred_element_type=jnp.float32)       # MXU, f32 acc
        row = acc + b_ref[...]                                   # (tm, tn)
        y_ref[...] = row.astype(y_ref.dtype)                     # bf16 store
        # Mask padded rows (>= M) and padded cols (>= Cout) with 0.0, which is
        # neutral because the 'max' scheme clamps min<=0<=max afterwards.
        i = pl.program_id(0)
        j = pl.program_id(1)
        row_ids = lax.broadcasted_iota(jnp.int32, (tm, tn), 0) + i * tm
        col_ids = lax.broadcasted_iota(jnp.int32, (tm, tn), 1) + j * tn
        valid = (row_ids < M) & (col_ids < Cout)
        masked = jnp.where(valid, row, 0.0)
        mn_ref[...] = jnp.broadcast_to(
            jnp.min(masked, axis=(0, 1), keepdims=True), (8, 128))
        mx_ref[...] = jnp.broadcast_to(
            jnp.max(masked, axis=(0, 1), keepdims=True), (8, 128))

    return pl.pallas_call(
        kernel,
        out_shape=(jax.ShapeDtypeStruct((Mpad, Npad), jnp.bfloat16),
                   jax.ShapeDtypeStruct((nm * 8, nn * 128), jnp.float32),
                   jax.ShapeDtypeStruct((nm * 8, nn * 128), jnp.float32)),
        grid=(nm, nn),
        in_specs=[
            pl.BlockSpec((tm, K), lambda i, j: (i, 0)),    # im2col rows
            pl.BlockSpec((K, tn), lambda i, j: (0, j)),    # dequantized weight
            pl.BlockSpec((1, tn), lambda i, j: (0, j)),    # bias
        ],
        out_specs=(
            pl.BlockSpec((tm, tn), lambda i, j: (i, j)),   # lane-dense output
            pl.BlockSpec((8, 128), lambda i, j: (i, j)),   # min partials
            pl.BlockSpec((8, 128), lambda i, j: (i, j)),   # max partials
        ),
        compiler_params=pltpu.CompilerParams(
            dimension_semantics=("parallel", "parallel"),
            vmem_limit_bytes=VMEM_LIMIT_BYTES,
        ),
    )(a, w, bias_row)


# ----------------- activation quant-dequant (tiled, drops padding) -----------

def _act_qdq(y, scal, *, Cout, tm):
    """Elementwise QDQ of the bf16 matmul output; writes only the Cout valid
    columns (padding columns are never written back)."""
    Mpad, Npad = y.shape
    nm = Mpad // tm

    def kernel(s_ref, y_ref, o_ref):
        delta = s_ref[0]
        zero_point = s_ref[1]
        inv_delta = s_ref[2]
        v = y_ref[...].astype(jnp.float32)
        x_int = jnp.round(v * inv_delta) + zero_point
        x_q = jnp.clip(x_int, 0.0, float(N_LEVELS - 1))
        deq = (x_q - zero_point) * delta
        o_ref[...] = deq[:, :Cout]

    return pl.pallas_call(
        kernel,
        out_shape=jax.ShapeDtypeStruct((Mpad, Cout), jnp.float32),
        grid_spec=pltpu.PrefetchScalarGridSpec(
            num_scalar_prefetch=1,
            grid=(nm,),
            in_specs=[pl.BlockSpec((tm, Npad), lambda i, s: (i, 0))],
            out_specs=pl.BlockSpec((tm, Cout), lambda i, s: (i, 0)),
        ),
        compiler_params=pltpu.CompilerParams(
            dimension_semantics=("parallel",),
            vmem_limit_bytes=VMEM_LIMIT_BYTES,
        ),
    )(scal, y)


# ------------------------------ QuantModule ---------------------------------

@functools.partial(jax.jit, static_argnames=("use_weight_quant", "use_act_quant",
                                              "disable_act_quant"))
def quant_module_forward(x_nchw, weight, bias, *, use_weight_quant=True,
                         use_act_quant=True, disable_act_quant=False):
    """Forward of QuantModule wrapping Conv2d(stride=1, padding=0, groups=1)."""
    B, Cin, H, W = x_nchw.shape
    Cout, Cin_w, KH, KW = weight.shape
    assert Cin_w == Cin
    OH, OW = H - KH + 1, W - KW + 1
    assert OH >= 1 and OW >= 1

    K = KH * KW * Cin
    Kp = _round_up(K, 8)                 # sublane-aligned contraction dim
    Npad = _round_up(Cout, 128)          # lane-dense output columns
    M = B * OH * OW

    tn = 128                             # 128-wide N tiles (native on v5e MXU)
    M8 = _round_up(M, 8)
    tm = min(256, M8)
    # Guarantee >=2 parallel grid tiles so v7x's two TensorCores both get work.
    if (pl.cdiv(M8, tm) * (Npad // tn)) < 2 and M8 >= 16:
        tm = _round_up(M8 // 2, 8)
    Mpad = _round_up(M, tm)

    # ---- weight path: tiled two-pass UniformAffineQuantizer -> bf16 -------
    # (Cout, Cin, KH, KW) -> (K, Cout) with k = (kh*KW + kw)*Cin + ci, then
    # zero-pad to (Kp, Npad).  Zero padding is neutral for the 'max' scheme
    # (min<=0<=max clamp) and QDQ(0) == 0, so it stays out of the matmul too.
    w_km = jnp.transpose(weight.astype(jnp.float32), (2, 3, 1, 0)).reshape(K, Cout)
    w_km = jnp.pad(w_km, ((0, Kp - K), (0, Npad - Cout)))
    if use_weight_quant:
        mn_w, mx_w = _minmax_partials(w_km)
        w_scal = _quant_params(jnp.min(mn_w), jnp.max(mx_w))
        w_q = _weight_qdq(w_km, w_scal)                      # bf16 dequantized
    else:
        w_q = w_km.astype(jnp.bfloat16)

    if bias is None:
        bias = jnp.zeros((Cout,), jnp.float32)
    bias_row = jnp.pad(bias.astype(jnp.float32), (0, Npad - Cout)).reshape(1, Npad)

    # ---- input: explicit im2col (small-Cin path), bf16 MXU operand --------
    x_nhwc = jnp.transpose(x_nchw.astype(jnp.bfloat16), (0, 2, 3, 1))
    cols = []
    for kh in range(KH):
        for kw in range(KW):
            cols.append(x_nhwc[:, kh:kh + OH, kw:kw + OW, :])   # (B,OH,OW,Cin)
    a = jnp.concatenate(cols, axis=-1).reshape(M, K)            # k-order matches w_km
    a = jnp.pad(a, ((0, Mpad - M), (0, Kp - K)))

    y_bf16, mn_a, mx_a = _matmul_bias_minmax(
        a, w_q, bias_row, M=M, Cout=Cout, tm=tm, tn=tn)

    # activation_function = StraightThrough -> identity
    if disable_act_quant or not use_act_quant:
        out_rows = y_bf16[:M, :Cout].astype(jnp.float32)
    else:
        a_scal = _quant_params(jnp.min(mn_a), jnp.max(mx_a))
        out_rows = _act_qdq(y_bf16, a_scal, Cout=Cout, tm=tm)[:M]

    out_nhwc = out_rows.reshape(B, OH, OW, Cout)
    return jnp.transpose(out_nhwc, (0, 3, 1, 2))     # single small NCHW transpose


# ------------------------------ pure-JAX ref ---------------------------------

def _reference_forward(x, w, b):
    def uaq(t):
        x_min = jnp.minimum(jnp.min(t), 0.0)
        x_max = jnp.maximum(jnp.max(t), 0.0)
        delta = jnp.maximum((x_max - x_min) / (N_LEVELS - 1), 1e-8)
        zp = jnp.round(-x_min / delta)
        xi = jnp.round(t / (delta + EPS)) + zp
        xq = jnp.clip(xi, 0.0, float(N_LEVELS - 1))
        return (xq - zp) * delta, delta

    wq, _ = uaq(w)
    out = lax.conv_general_dilated(
        x, wq, window_strides=(1, 1), padding="VALID",
        dimension_numbers=("NCHW", "OIHW", "NCHW"),
        precision=lax.Precision.HIGHEST)
    out = out + b.reshape(1, -1, 1, 1)
    out_q, act_delta = uaq(out)
    return out_q, act_delta


if __name__ == "__main__":
    key = jax.random.PRNGKey(0)
    k1, k2, k3 = jax.random.split(key, 3)

    B, Cin, H, W = 2, 4, 16, 16
    Cout, KH, KW = 8, 3, 3

    x = jax.random.normal(k1, (B, Cin, H, W), jnp.float32)
    weight = 0.1 * jax.random.normal(k2, (Cout, Cin, KH, KW), jnp.float32)
    bias = 0.1 * jax.random.normal(k3, (Cout,), jnp.float32)

    out = quant_module_forward(x, weight, bias,
                               use_weight_quant=True, use_act_quant=True)
    out = jax.block_until_ready(out)

    ref, act_delta = _reference_forward(x, weight, bias)
    assert out.shape == (B, Cout, H - KH + 1, W - KW + 1)
    assert bool(jnp.all(jnp.isfinite(out)))

    max_err = float(jnp.max(jnp.abs(out - ref)))
    mean_err = float(jnp.mean(jnp.abs(out - ref)))
    # bf16 MXU operands can move a handful of elements across a rounding
    # boundary of the 8-bit quantizer; bound the error in quant-bin units.
    tol = 4.0 * float(act_delta) + 1e-2
    assert max_err <= tol, (max_err, tol)
    assert mean_err <= 1e-2, mean_err

    print("KERNEL_OK")
</pallas_src>

<mosaic_0001>
module attributes {stable_mosaic.version = 11 : i64} {
  func.func @kernel(%arg0: i32, %arg1: memref<40x128xf32, #tpu.memory_space<vmem>>, %arg2: memref<8x128xf32, #tpu.memory_space<vmem>>, %arg3: memref<8x128xf32, #tpu.memory_space<vmem>>) attributes {dimension_semantics = [#tpu.dimension_semantics<parallel>], iteration_bounds = array<i64: 1>, scalar_prefetch = 0 : i64, scratch_operands = 0 : i64, tpu.core_type = #tpu.core_type<tc>, window_params = [{transform_indices = @transform_0, window_bounds = array<i64: 40, 128>}, {transform_indices = @transform_1, window_bounds = array<i64: 8, 128>}, {transform_indices = @transform_2, window_bounds = array<i64: 8, 128>}]} {
    %c0 = arith.constant 0 : index
    %c0_0 = arith.constant 0 : index
    %0 = vector.load %arg1[%c0, %c0_0] : memref<40x128xf32, #tpu.memory_space<vmem>>, vector<40x128xf32>
    %1 = vector.shape_cast %0 : vector<40x128xf32> to vector<1x40x128xf32>
    %cst = arith.constant dense<0x7F800000> : vector<1xf32>
    %2 = vector.multi_reduction <minimumf>, %1, %cst [1, 2] : vector<1x40x128xf32> to vector<1xf32>
    %3 = vector.shape_cast %2 : vector<1xf32> to vector<1x1x1xf32>
    %4 = vector.extract %3[0, 0, 0] : f32 from vector<1x1x1xf32>
    %5 = vector.broadcast %4 : f32 to vector<1x1xf32>
    %6 = vector.shape_cast %0 : vector<40x128xf32> to vector<1x40x128xf32>
    %cst_1 = arith.constant dense<0xFF800000> : vector<1xf32>
    %7 = vector.multi_reduction <maximumf>, %6, %cst_1 [1, 2] : vector<1x40x128xf32> to vector<1xf32>
    %8 = vector.shape_cast %7 : vector<1xf32> to vector<1x1x1xf32>
    %9 = vector.extract %8[0, 0, 0] : f32 from vector<1x1x1xf32>
    %10 = vector.broadcast %9 : f32 to vector<1x1xf32>
    %11 = vector.shape_cast %5 : vector<1x1xf32> to vector<1x1xf32>
    %12 = vector.broadcast %11 : vector<1x1xf32> to vector<8x128xf32>
    %c0_2 = arith.constant 0 : index
    %c0_3 = arith.constant 0 : index
    %13 = vector.load %arg2[%c0_2, %c0_3] : memref<8x128xf32, #tpu.memory_space<vmem>>, vector<8x128xf32>
    tpu.vector_store %arg2[%c0_2, %c0_3], %12 {strides = array<i32>} : memref<8x128xf32, #tpu.memory_space<vmem>>, vector<8x128xf32>,
    %14 = vector.shape_cast %10 : vector<1x1xf32> to vector<1x1xf32>
    %15 = vector.broadcast %14 : vector<1x1xf32> to vector<8x128xf32>
    %c0_4 = arith.constant 0 : index
    %c0_5 = arith.constant 0 : index
    %16 = vector.load %arg3[%c0_4, %c0_5] : memref<8x128xf32, #tpu.memory_space<vmem>>, vector<8x128xf32>
    tpu.vector_store %arg3[%c0_4, %c0_5], %15 {strides = array<i32>} : memref<8x128xf32, #tpu.memory_space<vmem>>, vector<8x128xf32>,
    return
  }
  func.func @transform_0(%arg0: i32) -> (i32, i32) {
    %c0_i32 = arith.constant 0 : i32
    %c0_i32_0 = arith.constant 0 : i32
    return %c0_i32, %arg0 : i32, i32
  }
  func.func @transform_1(%arg0: i32) -> (i32, i32) {
    %c0_i32 = arith.constant 0 : i32
    %c0_i32_0 = arith.constant 0 : i32
    return %arg0, %c0_i32 : i32, i32
  }
  func.func @transform_2(%arg0: i32) -> (i32, i32) {
    %c0_i32 = arith.constant 0 : i32
    %c0_i32_0 = arith.constant 0 : i32
    return %arg0, %c0_i32 : i32, i32
  }
}

module attributes {stable_mosaic.version = 11 : i64} {
  func.func @kernel(%arg0: i32, %arg1: memref<3xf32, #tpu.memory_space<smem>>, %arg2: memref<40x128xf32, #tpu.memory_space<vmem>>, %arg3: memref<40x128xbf16, #tpu.memory_space<vmem>>) attributes {dimension_semantics = [#tpu.dimension_semantics<parallel>], iteration_bounds = array<i64: 1>, scalar_prefetch = 1 : i64, scratch_operands = 0 : i64, tpu.core_type = #tpu.core_type<tc>, window_params = [{transform_indices = @transform_0, window_bounds = array<i64: 40, 128>}, {transform_indices = @transform_1, window_bounds = array<i64: 40, 128>}]} {
    %c0 = arith.constant 0 : index
    %0 = memref.load %arg1[%c0] : memref<3xf32, #tpu.memory_space<smem>>
    %c1 = arith.constant 1 : index
    %1 = memref.load %arg1[%c1] : memref<3xf32, #tpu.memory_space<smem>>
    %c2 = arith.constant 2 : index
    %2 = memref.load %arg1[%c2] : memref<3xf32, #tpu.memory_space<smem>>
    %c0_0 = arith.constant 0 : index
    %c0_1 = arith.constant 0 : index
    %3 = vector.load %arg2[%c0_0, %c0_1] : memref<40x128xf32, #tpu.memory_space<vmem>>, vector<40x128xf32>
    %4 = vector.broadcast %2 : f32 to vector<40x128xf32>
    %5 = arith.mulf %3, %4 : vector<40x128xf32>
    %6 = math.roundeven %5 : vector<40x128xf32>
    %7 = vector.broadcast %1 : f32 to vector<40x128xf32>
    %8 = arith.addf %6, %7 : vector<40x128xf32>
    %cst = arith.constant 0.000000e+00 : f32
    %cst_2 = arith.constant 2.550000e+02 : f32
    %9 = vector.broadcast %cst : f32 to vector<40x128xf32>
    %10 = arith.maximumf %9, %8 : vector<40x128xf32>
    %11 = vector.broadcast %cst_2 : f32 to vector<40x128xf32>
    %12 = arith.minimumf %11, %10 : vector<40x128xf32>
    %13 = vector.broadcast %1 : f32 to vector<40x128xf32>
    %14 = arith.subf %12, %13 : vector<40x128xf32>
    %15 = vector.broadcast %0 : f32 to vector<40x128xf32>
    %16 = arith.mulf %14, %15 : vector<40x128xf32>
    %17 = arith.truncf %16 : vector<40x128xf32> to vector<40x128xbf16>
    %c0_3 = arith.constant 0 : index
    %c0_4 = arith.constant 0 : index
    %18 = vector.load %arg3[%c0_3, %c0_4] : memref<40x128xbf16, #tpu.memory_space<vmem>>, vector<40x128xbf16>
    tpu.vector_store %arg3[%c0_3, %c0_4], %17 {strides = array<i32>} : memref<40x128xbf16, #tpu.memory_space<vmem>>, vector<40x128xbf16>,
    return
  }
  func.func @transform_0(%arg0: i32, %arg1: memref<3xf32, #tpu.memory_space<smem>>) -> (i32, i32) {
    %c0_i32 = arith.constant 0 : i32
    %c0_i32_0 = arith.constant 0 : i32
    return %c0_i32, %arg0 : i32, i32
  }
  func.func @transform_1(%arg0: i32, %arg1: memref<3xf32, #tpu.memory_space<smem>>) -> (i32, i32) {
    %c0_i32 = arith.constant 0 : i32
    %c0_i32_0 = arith.constant 0 : i32
    return %c0_i32, %arg0 : i32, i32
  }
}

module attributes {stable_mosaic.version = 11 : i64} {
  func.func @kernel(%arg0: i32, %arg1: i32, %arg2: memref<256x40xbf16, #tpu.memory_space<vmem>>, %arg3: memref<40x128xbf16, #tpu.memory_space<vmem>>, %arg4: memref<1x128xf32, #tpu.memory_space<vmem>>, %arg5: memref<256x128xbf16, #tpu.memory_space<vmem>>, %arg6: memref<8x128xf32, #tpu.memory_space<vmem>>, %arg7: memref<8x128xf32, #tpu.memory_space<vmem>>) attributes {dimension_semantics = [#tpu.dimension_semantics<parallel>, #tpu.dimension_semantics<parallel>], iteration_bounds = array<i64: 2, 1>, scalar_prefetch = 0 : i64, scratch_operands = 0 : i64, tpu.core_type = #tpu.core_type<tc>, window_params = [{transform_indices = @transform_0, window_bounds = array<i64: 256, 40>}, {transform_indices = @transform_1, window_bounds = array<i64: 40, 128>}, {transform_indices = @transform_2, window_bounds = array<i64: 1, 128>}, {transform_indices = @transform_3, window_bounds = array<i64: 256, 128>}, {transform_indices = @transform_4, window_bounds = array<i64: 8, 128>}, {transform_indices = @transform_5, window_bounds = array<i64: 8, 128>}]} {
    %c0 = arith.constant 0 : index
    %c0_0 = arith.constant 0 : index
    %0 = vector.load %arg2[%c0, %c0_0] : memref<256x40xbf16, #tpu.memory_space<vmem>>, vector<256x40xbf16>
    %c0_1 = arith.constant 0 : index
    %c0_2 = arith.constant 0 : index
    %1 = vector.load %arg3[%c0_1, %c0_2] : memref<40x128xbf16, #tpu.memory_space<vmem>>, vector<40x128xbf16>
    %cst = arith.constant dense<0.000000e+00> : vector<256x128xf32>
    %2 = tpu.matmul %0, %1, %cst {dimension_numbers = #tpu.dot_dimension_numbers<[1], [0], [0], [1], [0, 0, 1, 1], [], []>} : vector<256x40xbf16>, vector<40x128xbf16>, vector<256x128xf32> -> vector<256x128xf32>
    %c0_3 = arith.constant 0 : index
    %c0_4 = arith.constant 0 : index
    %3 = vector.load %arg4[%c0_3, %c0_4] : memref<1x128xf32, #tpu.memory_space<vmem>>, vector<1x128xf32>
    %4 = vector.broadcast %3 : vector<1x128xf32> to vector<256x128xf32>
    %5 = arith.addf %2, %4 : vector<256x128xf32>
    %6 = arith.truncf %5 : vector<256x128xf32> to vector<256x128xbf16>
    %c0_5 = arith.constant 0 : index
    %c0_6 = arith.constant 0 : index
    %7 = vector.load %arg5[%c0_5, %c0_6] : memref<256x128xbf16, #tpu.memory_space<vmem>>, vector<256x128xbf16>
    tpu.vector_store %arg5[%c0_5, %c0_6], %6 {strides = array<i32>} : memref<256x128xbf16, #tpu.memory_space<vmem>>, vector<256x128xbf16>,
    %8 = tpu.iota {dimensions = array<i32: 0>} : vector<256x128xi32>
    %c256_i32 = arith.constant 256 : i32
    %9 = arith.muli %arg0, %c256_i32 : i32
    %10 = vector.broadcast %9 : i32 to vector<256x128xi32>
    %11 = arith.addi %8, %10 : vector<256x128xi32>
    %12 = tpu.iota {dimensions = array<i32: 1>} : vector<256x128xi32>
    %c128_i32 = arith.constant 128 : i32
    %13 = arith.muli %arg1, %c128_i32 : i32
    %14 = vector.broadcast %13 : i32 to vector<256x128xi32>
    %15 = arith.addi %12, %14 : vector<256x128xi32>
    %c392_i32 = arith.constant 392 : i32
    %16 = vector.broadcast %c392_i32 : i32 to vector<256x128xi32>
    %17 = arith.cmpi slt, %11, %16 : vector<256x128xi32>
    %c8_i32 = arith.constant 8 : i32
    %18 = vector.broadcast %c8_i32 : i32 to vector<256x128xi32>
    %19 = arith.cmpi slt, %15, %18 : vector<256x128xi32>
    %20 = arith.andi %17, %19 : vector<256x128xi1>
    %cst_7 = arith.constant 0.000000e+00 : f32
    %21 = vector.broadcast %cst_7 : f32 to vector<256x128xf32>
    %22 = arith.select %20, %5, %21 : vector<256x128xi1>, vector<256x128xf32>
    %23 = vector.shape_cast %22 : vector<256x128xf32> to vector<1x256x128xf32>
    %cst_8 = arith.constant dense<0x7F800000> : vector<1xf32>
    %24 = vector.multi_reduction <minimumf>, %23, %cst_8 [1, 2] : vector<1x256x128xf32> to vector<1xf32>
    %25 = vector.shape_cast %24 : vector<1xf32> to vector<1x1x1xf32>
    %26 = vector.extract %25[0, 0, 0] : f32 from vector<1x1x1xf32>
    %27 = vector.broadcast %26 : f32 to vector<1x1xf32>
    %28 = vector.shape_cast %27 : vector<1x1xf32> to vector<1x1xf32>
    %29 = vector.broadcast %28 : vector<1x1xf32> to vector<8x128xf32>
    %c0_9 = arith.constant 0 : index
    %c0_10 = arith.constant 0 : index
    %30 = vector.load %arg6[%c0_9, %c0_10] : memref<8x128xf32, #tpu.memory_space<vmem>>, vector<8x128xf32>
    tpu.vector_store %arg6[%c0_9, %c0_10], %29 {strides = array<i32>} : memref<8x128xf32, #tpu.memory_space<vmem>>, vector<8x128xf32>,
    %31 = vector.shape_cast %22 : vector<256x128xf32> to vector<1x256x128xf32>
    %cst_11 = arith.constant dense<0xFF800000> : vector<1xf32>
    %32 = vector.multi_reduction <maximumf>, %31, %cst_11 [1, 2] : vector<1x256x128xf32> to vector<1xf32>
    %33 = vector.shape_cast %32 : vector<1xf32> to vector<1x1x1xf32>
    %34 = vector.extract %33[0, 0, 0] : f32 from vector<1x1x1xf32>
    %35 = vector.broadcast %34 : f32 to vector<1x1xf32>
    %36 = vector.shape_cast %35 : vector<1x1xf32> to vector<1x1xf32>
    %37 = vector.broadcast %36 : vector<1x1xf32> to vector<8x128xf32>
    %c0_12 = arith.constant 0 : index
    %c0_13 = arith.constant 0 : index
    %38 = vector.load %arg7[%c0_12, %c0_13] : memref<8x128xf32, #tpu.memory_space<vmem>>, vector<8x128xf32>
    tpu.vector_store %arg7[%c0_12, %c0_13], %37 {strides = array<i32>} : memref<8x128xf32, #tpu.memory_space<vmem>>, vector<8x128xf32>,
    return
  }
  func.func @transform_0(%arg0: i32, %arg1: i32) -> (i32, i32) {
    %c0_i32 = arith.constant 0 : i32
    %c0_i32_0 = arith.constant 0 : i32
    return %arg0, %c0_i32 : i32, i32
  }
  func.func @transform_1(%arg0: i32, %arg1: i32) -> (i32, i32) {
    %c0_i32 = arith.constant 0 : i32
    %c0_i32_0 = arith.constant 0 : i32
    return %c0_i32, %arg1 : i32, i32
  }
  func.func @transform_2(%arg0: i32, %arg1: i32) -> (i32, i32) {
    %c0_i32 = arith.constant 0 : i32
    %c0_i32_0 = arith.constant 0 : i32
    return %c0_i32, %arg1 : i32, i32
  }
  func.func @transform_3(%arg0: i32, %arg1: i32) -> (i32, i32) {
    %c0_i32 = arith.constant 0 : i32
    return %arg0, %arg1 : i32, i32
  }
  func.func @transform_4(%arg0: i32, %arg1: i32) -> (i32, i32) {
    %c0_i32 = arith.constant 0 : i32
    return %arg0, %arg1 : i32, i32
  }
  func.func @transform_5(%arg0: i32, %arg1: i32) -> (i32, i32) {
    %c0_i32 = arith.constant 0 : i32
    return %arg0, %arg1 : i32, i32
  }
}

module attributes {stable_mosaic.version = 11 : i64} {
  func.func @kernel(%arg0: i32, %arg1: memref<3xf32, #tpu.memory_space<smem>>, %arg2: memref<256x128xbf16, #tpu.memory_space<vmem>>, %arg3: memref<256x8xf32, #tpu.memory_space<vmem>>) attributes {dimension_semantics = [#tpu.dimension_semantics<parallel>], iteration_bounds = array<i64: 2>, scalar_prefetch = 1 : i64, scratch_operands = 0 : i64, tpu.core_type = #tpu.core_type<tc>, window_params = [{transform_indices = @transform_0, window_bounds = array<i64: 256, 128>}, {transform_indices = @transform_1, window_bounds = array<i64: 256, 8>}]} {
    %c0 = arith.constant 0 : index
    %0 = memref.load %arg1[%c0] : memref<3xf32, #tpu.memory_space<smem>>
    %c1 = arith.constant 1 : index
    %1 = memref.load %arg1[%c1] : memref<3xf32, #tpu.memory_space<smem>>
    %c2 = arith.constant 2 : index
    %2 = memref.load %arg1[%c2] : memref<3xf32, #tpu.memory_space<smem>>
    %c0_0 = arith.constant 0 : index
    %c0_1 = arith.constant 0 : index
    %3 = vector.load %arg2[%c0_0, %c0_1] : memref<256x128xbf16, #tpu.memory_space<vmem>>, vector<256x128xbf16>
    %4 = arith.extf %3 : vector<256x128xbf16> to vector<256x128xf32>
    %5 = vector.broadcast %2 : f32 to vector<256x128xf32>
    %6 = arith.mulf %4, %5 : vector<256x128xf32>
    %7 = math.roundeven %6 : vector<256x128xf32>
    %8 = vector.broadcast %1 : f32 to vector<256x128xf32>
    %9 = arith.addf %7, %8 : vector<256x128xf32>
    %cst = arith.constant 0.000000e+00 : f32
    %cst_2 = arith.constant 2.550000e+02 : f32
    %10 = vector.broadcast %cst : f32 to vector<256x128xf32>
    %11 = arith.maximumf %10, %9 : vector<256x128xf32>
    %12 = vector.broadcast %cst_2 : f32 to vector<256x128xf32>
    %13 = arith.minimumf %12, %11 : vector<256x128xf32>
    %14 = vector.broadcast %1 : f32 to vector<256x128xf32>
    %15 = arith.subf %13, %14 : vector<256x128xf32>
    %16 = vector.broadcast %0 : f32 to vector<256x128xf32>
    %17 = arith.mulf %15, %16 : vector<256x128xf32>
    %18 = vector.extract_strided_slice %17 {offsets = [0, 0], sizes = [256, 8], strides = [1, 1]} : vector<256x128xf32> to vector<256x8xf32>
    %c0_3 = arith.constant 0 : index
    %c0_4 = arith.constant 0 : index
    %19 = vector.load %arg3[%c0_3, %c0_4] : memref<256x8xf32, #tpu.memory_space<vmem>>, vector<256x8xf32>
    tpu.vector_store %arg3[%c0_3, %c0_4], %18 {strides = array<i32>} : memref<256x8xf32, #tpu.memory_space<vmem>>, vector<256x8xf32>,
    return
  }
  func.func @transform_0(%arg0: i32, %arg1: memref<3xf32, #tpu.memory_space<smem>>) -> (i32, i32) {
    %c0_i32 = arith.constant 0 : i32
    %c0_i32_0 = arith.constant 0 : i32
    return %arg0, %c0_i32 : i32, i32
  }
  func.func @transform_1(%arg0: i32, %arg1: memref<3xf32, #tpu.memory_space<smem>>) -> (i32, i32) {
    %c0_i32 = arith.constant 0 : i32
    %c0_i32_0 = arith.constant 0 : i32
    return %arg0, %c0_i32 : i32, i32
  }
}

</mosaic_0001>

<llo_original>
// kernel: quant_module_forward.5
$region0: #{quant_module_forward.5}
  #allocation0 [shape = 'u32[]', space=smem, size = 0x4, offset = 0x4, fixed_abs, tag = 'smem constant byte address 0x4 - core index']
  #allocation1 [shape = 'u32[144,128]{1,0:T(1,128)}', space=vmem, size = 0x12000, scoped, tag = 'internal scratch']
  #allocation2 [shape = 's32[1]{0}', space=sflag, size = 0x4, scoped, tag = 'scoped memory for quant_module_forward.5']
  #allocation3 [shape = 'u8[512]{0}', space=smem, size = 0x200, scoped, tag = 'prefetched SMEM operand 0']
  %s0 = inlined_call_operand.hbm [shape: f32[3], index: 0, kind: input, shape index: {}]
  %s1 = inlined_call_operand.hbm [shape: f32[40,128], index: 1, kind: input, shape index: {}]
  %s2 = inlined_call_operand.hbm [shape: bf16[40,128], index: 2, kind: output, shape index: {}]
  %s3 = sld [smem:[#allocation0]]
  $region18: #{quant_module_forward.5} parent=0
    _
  %s5 = ssub.s32 1, %s3
  %s6 = scalar_select 0, %s5, %s3
  %8 = dma.hbm_to_smem %s0, 16, [#allocation3], [#allocation2]
  %9 = dma.done [#allocation2], 16
  %10 = sfence
  $region1: #{quant_module_forward.5} parent=0
    #allocation4 [shape = 'u8[20480]{0}', space=vmem, size = 0x5000, scoped, tag = 'input window, operand 1, single buffered']
    #allocation5 [shape = 's32[1]{0}', space=sflag, size = 0x4, scoped, tag = 'scoped memory for quant_module_forward.5']
    #allocation6 [shape = 's32[1]{0}', space=sflag, size = 0x4, scoped, tag = 'scoped memory for quant_module_forward.5']
    #allocation7 [shape = 'u8[10240]{0}', space=vmem, size = 0x2800, scoped, tag = 'output window, operand 0, single buffered']
    %11 = vsyncpa [#allocation5], 0
    %12 = vsyncpa [#allocation6], 0
    // Predicated region
    $region2: #{quant_module_forward.5} parent=1 // pred_check
      _
    $region3: #{quant_module_forward.5} parent=1 // pred_check_branch
      %14 = sbr.rel (0) target = $region5
    $region4: #{quant_module_forward.5} parent=1 // pred_region
      %s16 = ssub.s32 640, 640
      %17 = vsyncadd [#allocation5], %s16
      %s18 = sshll.u32 [#allocation4], 4
      %s19 = int_to_ptr.vmem [resolvable:$true] %s18
      %24 = dma.hbm_to_vmem [thread:$0]  %s1, 640, %s19, [#allocation5], 128, 128, 8
    $region5: #{quant_module_forward.5} parent=1 // pred_fallthru
      _
    // Predicated region
    $region6: #{quant_module_forward.5} parent=1 // pred_check
      _
    $region7: #{quant_module_forward.5} parent=1 // pred_check_branch
      %26 = sbr.rel (0) target = $region9
    $region8: #{quant_module_forward.5} parent=1 // pred_region
      %27 = dma.done [#allocation5], 640
    $region9: #{quant_module_forward.5} parent=1 // pred_fallthru
      _
    %s28 = sld [smem:[#allocation3]]
    %s29 = sld [smem:[#allocation3 + $0x1]]
    %s30 = sld [smem:[#allocation3 + $0x2]]
    %v31 = vld [vmem:[#allocation4] sm:$0xff]
    %v32 = vld [vmem:[#allocation4 + $0x8] sm:$0xff]
    %v33 = vld [vmem:[#allocation4 + $0x10] sm:$0xff]
    %v34 = vld [vmem:[#allocation4 + $0x18] sm:$0xff]
    %v35 = vld [vmem:[#allocation4 + $0x20] sm:$0xff]
    %v36 = vstv %s30
    %v37 = vmul.f32 %v31, %v36
    %v38 = vmul.f32 %v32, %v36
    %v39 = vmul.f32 %v33, %v36
    %v40 = vmul.f32 %v34, %v36
    %v41 = vmul.f32 %v35, %v36
    %v42 = vround.ne.pseudo %v37
    %v43 = vround.ne.pseudo %v38
    %v44 = vround.ne.pseudo %v39
    %v45 = vround.ne.pseudo %v40
    %v46 = vround.ne.pseudo %v41
    %v47 = vstv %s29
    %v48 = vadd.f32 %v42, %v47
    %v49 = vadd.f32 %v43, %v47
    %v50 = vadd.f32 %v44, %v47
    %v51 = vadd.f32 %v45, %v47
    %v52 = vadd.f32 %v46, %v47
    %v53 = vmax.f32 %v48, 0.0
    %v54 = vmax.f32 %v49, 0.0
    %v55 = vmax.f32 %v50, 0.0
    %v56 = vmax.f32 %v51, 0.0
    %v57 = vmax.f32 %v52, 0.0
    %v58 = vmin.f32 %v53, 255.0
    %v59 = vmin.f32 %v54, 255.0
    %v60 = vmin.f32 %v55, 255.0
    %v61 = vmin.f32 %v56, 255.0
    %v62 = vmin.f32 %v57, 255.0
    %v63 = vsub.f32 %v58, %v47
    %v64 = vsub.f32 %v59, %v47
    %v65 = vsub.f32 %v60, %v47
    %v66 = vsub.f32 %v61, %v47
    %v67 = vsub.f32 %v62, %v47
    %v68 = vstv %s28
    %v69 = vmul.f32 %v63, %v68
    %v70 = vmul.f32 %v64, %v68
    %v71 = vmul.f32 %v65, %v68
    %v72 = vmul.f32 %v66, %v68
    %v73 = vmul.f32 %v67, %v68
    %v74 = vpack.c.bf16 %v70, %v69
    %v75 = vpack.c.bf16 %v72, %v71
    %v76 = vpack.c.bf16 %v73, %v73
    %v80 = vunpack.c.l.b16 %v74
    %v81 = vunpack.c.h.b16 %v74
    %v82 = vunpack.c.l.b16 %v75
    %v83 = vunpack.c.h.b16 %v75
    %v84 = vunpack.c.l.b16 %v76
    %v85 = vpack.c.b16 %v80, %v80
    %v86 = vpack.c.b16 %v81, %v81
    %v87 = vpack.c.b16 %v82, %v82
    %v88 = vpack.c.b16 %v83, %v83
    %v89 = vpack.c.b16 %v84, %v84
    %95 = vst [vmem:[#allocation7] sm:$0xf] %v85
    %96 = vst [vmem:[#allocation7 + $0x4] sm:$0xf] %v86
    %97 = vst [vmem:[#allocation7 + $0x8] sm:$0xf] %v87
    %98 = vst [vmem:[#allocation7 + $0xc] sm:$0xf] %v88
    %99 = vst [vmem:[#allocation7 + $0x10] sm:$0xf] %v89
    // Predicated region
    $region10: #{quant_module_forward.5} parent=1 // pred_check
      _
    $region11: #{quant_module_forward.5} parent=1 // pred_check_branch
      %101 = sbr.rel (0) target = $region13
    $region12: #{quant_module_forward.5} parent=1 // pred_region
      %s103 = ssub.s32 320, 320
      %104 = vsyncadd [#allocation6], %s103
      %s105 = sshll.u32 [#allocation7], 4
      %s106 = int_to_ptr.vmem [resolvable:$true] %s105
      %111 = dma.vmem_to_hbm [thread:$0]  %s106, 320, %s2, [#allocation6], 64, 64, 4
    $region13: #{quant_module_forward.5} parent=1 // pred_fallthru
      _
    // Predicated region
    $region14: #{quant_module_forward.5} parent=1 // pred_check
      _
    $region15: #{quant_module_forward.5} parent=1 // pred_check_branch
      %113 = sbr.rel (0) target = $region17
    $region16: #{quant_module_forward.5} parent=1 // pred_region
      %114 = dma.done [#allocation6], 320
    $region17: #{quant_module_forward.5} parent=1 // pred_fallthru
      _
    %115 = vsyncpa [#allocation5], 1
    %116 = vsyncpa [#allocation6], 1

// kernel: quant_module_forward.4
$region0: #{quant_module_forward.4}
  #allocation0 [shape = 'u32[]', space=smem, size = 0x4, offset = 0x4, fixed_abs, tag = 'smem constant byte address 0x4 - core index']
  #allocation1 [shape = 'u32[144,128]{1,0:T(1,128)}', space=vmem, size = 0x12000, scoped, tag = 'internal scratch']
  %s0 = inlined_call_operand.hbm [shape: f32[40,128], index: 0, kind: input, shape index: {}]
  %s1 = inlined_call_operand.hbm [shape: f32[8,128], index: 1, kind: output, shape index: {0}]
  %s2 = inlined_call_operand.hbm [shape: f32[8,128], index: 2, kind: output, shape index: {1}]
  %3 = xla_tuple %s1, %s2
  %s4 = sld [smem:[#allocation0]]
  $region26: #{quant_module_forward.4} parent=0
    _
  %s6 = ssub.s32 1, %s4
  %s7 = scalar_select 0, %s6, %s4
  $region1: #{quant_module_forward.4} parent=0
    #allocation2 [shape = 'u8[20480]{0}', space=vmem, size = 0x5000, scoped, tag = 'input window, operand 0, single buffered']
    #allocation3 [shape = 's32[1]{0}', space=sflag, size = 0x4, scoped, tag = 'scoped memory for quant_module_forward.4']
    #allocation4 [shape = 's32[1]{0}', space=sflag, size = 0x4, scoped, tag = 'scoped memory for quant_module_forward.4']
    #allocation5 [shape = 'u8[4096]{0}', space=vmem, size = 0x1000, scoped, tag = 'output window, operand 0, single buffered']
    #allocation6 [shape = 'u8[4096]{0}', space=vmem, size = 0x1000, scoped, tag = 'output window, operand 1, single buffered']
    #allocation7 [shape = 's32[1]{0}', space=sflag, size = 0x4, scoped, tag = 'scoped memory for quant_module_forward.4']
    %8 = vsyncpa [#allocation3], 0
    %9 = vsyncpa [#allocation4], 0
    %10 = vsyncpa [#allocation7], 0
    // Predicated region
    $region2: #{quant_module_forward.4} parent=1 // pred_check
      _
    $region3: #{quant_module_forward.4} parent=1 // pred_check_branch
      %12 = sbr.rel (0) target = $region5
    $region4: #{quant_module_forward.4} parent=1 // pred_region
      %s14 = ssub.s32 640, 640
      %15 = vsyncadd [#allocation3], %s14
      %s16 = sshll.u32 [#allocation2], 4
      %s17 = int_to_ptr.vmem [resolvable:$true] %s16
      %22 = dma.hbm_to_vmem [thread:$0]  %s0, 640, %s17, [#allocation3], 128, 128, 8
    $region5: #{quant_module_forward.4} parent=1 // pred_fallthru
      _
    // Predicated region
    $region6: #{quant_module_forward.4} parent=1 // pred_check
      _
    $region7: #{quant_module_forward.4} parent=1 // pred_check_branch
      %24 = sbr.rel (0) target = $region9
    $region8: #{quant_module_forward.4} parent=1 // pred_region
      %25 = dma.done [#allocation3], 640
    $region9: #{quant_module_forward.4} parent=1 // pred_fallthru
      _
    %v26 = vld [vmem:[#allocation2] sm:$0xff]
    %v27 = vld [vmem:[#allocation2 + $0x8] sm:$0xff]
    %v28 = vld [vmem:[#allocation2 + $0x10] sm:$0xff]
    %v29 = vld [vmem:[#allocation2 + $0x18] sm:$0xff]
    %v30 = vld [vmem:[#allocation2 + $0x20] sm:$0xff]
    %v31 = vmin.f32 %v26, %v30
    %v32 = vmin.f32 %v31, %v27
    %v33 = vmin.f32 %v28, %v29
    %v34 = vmin.f32 %v32, %v33
    %35 = vmin.xlane.f32.xlu0 %v34
    %v36 = vpop.xlane.xlu0 %35
    %v37 = vrot.slane %v36, 4
    %v38 = vmin.f32 %v36, %v37
    %v39 = vrot.slane %v38, 2
    %v40 = vmin.f32 %v38, %v39
    %v41 = vrot.slane %v40, 1
    %v42 = vmin.f32 %v40, %v41
    %s43 = vtos %v42
    %v44 = vmax.f32 %v26, %v30
    %v45 = vmax.f32 %v44, %v27
    %v46 = vmax.f32 %v28, %v29
    %v47 = vmax.f32 %v45, %v46
    %48 = vmax.xlane.f32.xlu0 %v47
    %v49 = vpop.xlane.xlu0 %48
    %v50 = vrot.slane %v49, 4
    %v51 = vmax.f32 %v49, %v50
    %v52 = vrot.slane %v51, 2
    %v53 = vmax.f32 %v51, %v52
    %v54 = vrot.slane %v53, 1
    %v55 = vmax.f32 %v53, %v54
    %s56 = vtos %v55
    %v57 = vstv %s43
    %58 = vst [vmem:[#allocation5] sm:$0xff] %v57
    %v59 = vstv %s56
    %60 = vst [vmem:[#allocation6] sm:$0xff] %v59
    // Predicated region
    $region10: #{quant_module_forward.4} parent=1 // pred_check
      _
    $region11: #{quant_module_forward.4} parent=1 // pred_check_branch
      %62 = sbr.rel (0) target = $region13
    $region12: #{quant_module_forward.4} parent=1 // pred_region
      %s64 = ssub.s32 128, 128
      %65 = vsyncadd [#allocation4], %s64
      %s67 = sshll.u32 [#allocation5], 4
      %s68 = int_to_ptr.vmem [resolvable:$true] %s67
      %70 = dma.vmem_to_hbm [thread:$0]  %s68, 128, %s1, [#allocation4]
    $region13: #{quant_module_forward.4} parent=1 // pred_fallthru
      _
    // Predicated region
    $region14: #{quant_module_forward.4} parent=1 // pred_check
      _
    $region15: #{quant_module_forward.4} parent=1 // pred_check_branch
      %72 = sbr.rel (0) target = $region17
    $region16: #{quant_module_forward.4} parent=1 // pred_region
      %s74 = ssub.s32 128, 128
      %75 = vsyncadd [#allocation7], %s74
      %s77 = sshll.u32 [#allocation6], 4
      %s78 = int_to_ptr.vmem [resolvable:$true] %s77
      %80 = dma.vmem_to_hbm [thread:$0]  %s78, 128, %s2, [#allocation7]
    $region17: #{quant_module_forward.4} parent=1 // pred_fallthru
      _
    // Predicated region
    $region18: #{quant_module_forward.4} parent=1 // pred_check
      _
    $region19: #{quant_module_forward.4} parent=1 // pred_check_branch
      %82 = sbr.rel (0) target = $region21
    $region20: #{quant_module_forward.4} parent=1 // pred_region
      %83 = dma.done [#allocation4], 128
    $region21: #{quant_module_forward.4} parent=1 // pred_fallthru
      _
    // Predicated region
    $region22: #{quant_module_forward.4} parent=1 // pred_check
      _
    $region23: #{quant_module_forward.4} parent=1 // pred_check_branch
      %85 = sbr.rel (0) target = $region25
    $region24: #{quant_module_forward.4} parent=1 // pred_region
      %86 = dma.done [#allocation7], 128
    $region25: #{quant_module_forward.4} parent=1 // pred_fallthru
      _
    %87 = vsyncpa [#allocation3], 1
    %88 = vsyncpa [#allocation4], 1
    %89 = vsyncpa [#allocation7], 1

// kernel: quant_module_forward.7
$region0: #{quant_module_forward.7}
  #allocation0 [shape = 'u32[]', space=smem, size = 0x4, offset = 0x4, fixed_abs, tag = 'smem constant byte address 0x4 - core index']
  #allocation1 [shape = 'u32[144,128]{1,0:T(1,128)}', space=vmem, size = 0x12000, scoped, tag = 'internal scratch']
  #allocation2 [shape = 's32[1]{0}', space=sflag, size = 0x4, scoped, tag = 'scoped memory for quant_module_forward.7']
  #allocation3 [shape = 'u8[512]{0}', space=smem, size = 0x200, scoped, tag = 'prefetched SMEM operand 0']
  %s0 = inlined_call_operand.hbm [shape: f32[3], index: 0, kind: input, shape index: {}]
  %s1 = inlined_call_operand.hbm [shape: bf16[512,128], index: 1, kind: input, shape index: {}]
  %s2 = inlined_call_operand.hbm [shape: f32[512,8], index: 2, kind: output, shape index: {}]
  %s3 = sld [smem:[#allocation0]]
  $region41: #{quant_module_forward.7} parent=0
    _
  %s5 = ssub.s32 1, %s3
  %s6 = scalar_select 0, %s5, %s3
  %8 = dma.hbm_to_smem %s0, 16, [#allocation3], [#allocation2]
  %9 = dma.done [#allocation2], 16
  %10 = sfence
  $region1: #{quant_module_forward.7} parent=0
    #allocation4 [shape = 'u8[131072]{0}', space=vmem, size = 0x20000, scoped, tag = 'input window, operand 1']
    #allocation5 [shape = 's32[2]{0}', space=sflag, size = 0x8, scoped, tag = 'scoped memory for quant_module_forward.7']
    #allocation6 [shape = 's32[2]{0}', space=sflag, size = 0x8, scoped, tag = 'scoped memory for quant_module_forward.7']
    #allocation7 [shape = 'u8[262144]{0}', space=vmem, size = 0x40000, scoped, tag = 'output window, operand 0']
    %11 = vsyncpa [#allocation5], 0
    %s12 = scalar_lea.sflag [#allocation5], 1
    %13 = vsyncpa %s12, 0
    %14 = vsyncpa [#allocation6], 0
    %s15 = scalar_lea.sflag [#allocation6], 1
    %16 = vsyncpa %s15, 0
    loop: start=0, step=1, limit=4
    $region2: #{quant_module_forward.7} parent=1 // loop_pre_header
      _
    $region3: #{quant_module_forward.7} parent=1 // loop_header
      %s18 = sphi 0, %s22
      %p19 = scmp.ge.s32.totalorder %s18, 4
      %s28 = sphi 0, %s30
      %s31 = sphi 0, %s28
      %s32 = sphi 0, %s31
      %s48 = sphi 0, %s32
      %s54 = sphi 0, %s56
      %s57 = sphi 0, %s54
      %s58 = sphi 0, %s57
      %s74 = sphi 0, %s58
    $region4: #{quant_module_forward.7} parent=1 // loop_header_branch
      %21 = sbr.rel (%p19) target = $region8
    $region5: #{quant_module_forward.7} parent=1 // loop_body
      %s23 = ssub.s32 %s18, 1
      %s24 = ssub.s32 %s18, 2
      %s25 = sadd.s32 %s18, 1
      %s26 = ssub.s32 %s18, %s25
      %p27 = scmp.eq.s32.totalorder %s26, 0
      %s29 = sadd.s32 %s28, 1
      %s30 = scalar_select %p27, %s28, %s29
      %p33 = pneg %p27
      %p34 = scmp.eq.s32.totalorder %s18, 1
      %p35 = por %p33, %p34
      %p36 = scmp.ne.s32.totalorder %s28, %s31
      %p37 = scmp.eq.s32.totalorder %s18, 0
      %p38 = por %p36, %p37
      %p39 = scmp.ne.s32.totalorder %s28, %s31
      %p40 = scmp.eq.s32.totalorder %s23, 1
      %p41 = por %p39, %p40
      %p42 = scmp.ne.s32.totalorder %s31, %s32
      %p43 = scmp.eq.s32.totalorder %s23, 0
      %p44 = por %p42, %p43
      %p45 = scmp.ne.s32.totalorder %s31, %s32
      %p46 = scmp.eq.s32.totalorder %s24, 1
      %p47 = por %p45, %p46
      %p49 = scmp.ne.s32.totalorder %s32, %s48
      %p50 = scmp.eq.s32.totalorder %s24, 0
      %p51 = por %p49, %p50
      %s52 = ssub.s32 %s18, %s25
      %p53 = scmp.eq.s32.totalorder %s52, 0
      %s55 = sadd.s32 %s54, 1
      %s56 = scalar_select %p53, %s54, %s55
      %p59 = pneg %p53
      %p60 = scmp.eq.s32.totalorder %s18, 1
      %p61 = por %p59, %p60
      %p62 = scmp.ne.s32.totalorder %s54, %s57
      %p63 = scmp.eq.s32.totalorder %s18, 0
      %p64 = por %p62, %p63
      %p65 = scmp.ne.s32.totalorder %s54, %s57
      %p66 = scmp.eq.s32.totalorder %s23, 1
      %p67 = por %p65, %p66
      %p68 = scmp.ne.s32.totalorder %s57, %s58
      %p69 = scmp.eq.s32.totalorder %s23, 0
      %p70 = por %p68, %p69
      %p71 = scmp.ne.s32.totalorder %s57, %s58
      %p72 = scmp.eq.s32.totalorder %s24, 1
      %p73 = por %p71, %p72
      %p75 = scmp.ne.s32.totalorder %s58, %s74
      %p76 = scmp.eq.s32.totalorder %s24, 0
      %p77 = por %p75, %p76
      %p78 = scmp.le.s32.totalorder 1, %s18
      %p79 = scmp.lt.s32.totalorder %s18, 3
      %p80 = pnand %p78, %p79
      %p81 = pneg %p80
      // Predicated region
      $region9: #{quant_module_forward.7} parent=5 // pred_check
        _
      $region10: #{quant_module_forward.7} parent=5 // pred_check_branch
        %83 = sbr.rel (%p80) target = $region12
      $region11: #{quant_module_forward.7} parent=5 // pred_region
        %s84 = ssub.s32 %s18, 1
      $region12: #{quant_module_forward.7} parent=5 // pred_fallthru
        _
      %p85 = scmp.lt.s32.totalorder %s18, 2
      // Predicated region
      $region13: #{quant_module_forward.7} parent=5 // pred_check
        %p86 = pneg %p85
      $region14: #{quant_module_forward.7} parent=5 // pred_check_branch
        %88 = sbr.rel (%p86) target = $region16
      $region15: #{quant_module_forward.7} parent=5 // pred_region
        // Predicated region
        $region17: #{quant_module_forward.7} parent=15 // pred_check
          %p89 = pneg %p38
        $region18: #{quant_module_forward.7} parent=15 // pred_check_branch
          %91 = sbr.rel (%p89) target = $region20
        $region19: #{quant_module_forward.7} parent=15 // pred_region
          %s92 = sand.u32 %s28, 1
          %s93 = scalar_lea.sflag [#allocation5], %s92
          %s94 = sand.u32 %s28, 1
          %s95 = smul.addr %s94, 128
          %s96 = scalar_lea.vmem [#allocation4], %s95
          %s97 = smul.u32 32, %s18
          %s99 = ssub.s32 2048, 2048
          %100 = vsyncadd %s93, %s99
          %s101 = smul.addr %s97, 64
          %s102 = scalar_lea.hbm %s1, %s101
          %s103 = sshll.u32 %s96, 4
          %s104 = int_to_ptr.vmem [resolvable:$true] %s103
          %109 = dma.hbm_to_vmem [thread:$0]  %s102, 2048, %s104, %s93, 64, 64, 4
        $region20: #{quant_module_forward.7} parent=15 // pred_fallthru
          _
      $region16: #{quant_module_forward.7} parent=5 // pred_fallthru
        _
      %p110 = scmp.le.s32.totalorder 1, %s18
      %p111 = scmp.lt.s32.totalorder %s18, 3
      %p112 = pnand %p110, %p111
      %p113 = pneg %p112
      // Predicated region
      $region21: #{quant_module_forward.7} parent=5 // pred_check
        _
      $region22: #{quant_module_forward.7} parent=5 // pred_check_branch
        %115 = sbr.rel (%p112) target = $region24
      $region23: #{quant_module_forward.7} parent=5 // pred_region
        %s116 = ssub.s32 %s18, 1
        %s117 = sand.u32 %s31, 1
        %s118 = scalar_lea.sflag [#allocation5], %s117
        %s119 = sand.u32 %s31, 1
        %s120 = smul.addr %s119, 128
        %s121 = scalar_lea.vmem [#allocation4], %s120
        // Predicated region
        $region25: #{quant_module_forward.7} parent=23 // pred_check
          %p122 = pneg %p44
        $region26: #{quant_module_forward.7} parent=23 // pred_check_branch
          %124 = sbr.rel (%p122) target = $region28
        $region27: #{quant_module_forward.7} parent=23 // pred_region
          %125 = dma.done %s118, 2048
        $region28: #{quant_module_forward.7} parent=23 // pred_fallthru
          _
        %s126 = sand.u32 %s31, 1
        %s127 = scalar_lea.sflag [#allocation5], %s126
        %s128 = sand.u32 %s31, 1
        %s129 = smul.addr %s128, 128
        %s130 = scalar_lea.vmem [#allocation4], %s129
        %p131 = pneg %p44
        %p132 = pneg %p41
        %p133 = pneg %p70
        %p134 = pneg %p67
        %s135 = sand.u32 %s57, 1
        %s136 = scalar_lea.sflag [#allocation6], %s135
        %s137 = sand.u32 %s57, 1
        %s138 = smul.addr %s137, 256
        %s139 = scalar_lea.vmem [#allocation7], %s138
        %s140 = smul.u32 32, %s23
        %s141 = smul.u32 32, %s23
        %s142 = sld [smem:[#allocation3]]
        %s143 = sld [smem:[#allocation3 + $0x1]]
        %s144 = sld [smem:[#allocation3 + $0x2]]
        %v145 = vld [vmem:[%s121] sm:$0xf]
        %v146 = vld [vmem:[%s121 + $0x4] sm:$0xf]
        %v147 = vld [vmem:[%s121 + $0x8] sm:$0xf]
        %v148 = vld [vmem:[%s121 + $0xc] sm:$0xf]
        %v149 = vld [vmem:[%s121 + $0x10] sm:$0xf]
        %v150 = vld [vmem:[%s121 + $0x14] sm:$0xf]
        %v151 = vld [vmem:[%s121 + $0x18] sm:$0xf]
        %v152 = vld [vmem:[%s121 + $0x1c] sm:$0xf]
        %v153 = vld [vmem:[%s121 + $0x20] sm:$0xf]
        %v154 = vld [vmem:[%s121 + $0x24] sm:$0xf]
        %v155 = vld [vmem:[%s121 + $0x28] sm:$0xf]
        %v156 = vld [vmem:[%s121 + $0x2c] sm:$0xf]
        %v157 = vld [vmem:[%s121 + $0x30] sm:$0xf]
        %v158 = vld [vmem:[%s121 + $0x34] sm:$0xf]
        %v159 = vld [vmem:[%s121 + $0x38] sm:$0xf]
        %v160 = vld [vmem:[%s121 + $0x3c] sm:$0xf]
        %v161 = vld [vmem:[%s121 + $0x40] sm:$0xf]
        %v162 = vld [vmem:[%s121 + $0x44] sm:$0xf]
        %v163 = vld [vmem:[%s121 + $0x48] sm:$0xf]
        %v164 = vld [vmem:[%s121 + $0x4c] sm:$0xf]
        %v165 = vld [vmem:[%s121 + $0x50] sm:$0xf]
        %v166 = vld [vmem:[%s121 + $0x54] sm:$0xf]
        %v167 = vld [vmem:[%s121 + $0x58] sm:$0xf]
        %v168 = vld [vmem:[%s121 + $0x5c] sm:$0xf]
        %v169 = vld [vmem:[%s121 + $0x60] sm:$0xf]
        %v170 = vld [vmem:[%s121 + $0x64] sm:$0xf]
        %v171 = vld [vmem:[%s121 + $0x68] sm:$0xf]
        %v172 = vld [vmem:[%s121 + $0x6c] sm:$0xf]
        %v173 = vld [vmem:[%s121 + $0x70] sm:$0xf]
        %v174 = vld [vmem:[%s121 + $0x74] sm:$0xf]
        %v175 = vld [vmem:[%s121 + $0x78] sm:$0xf]
        %v176 = vld [vmem:[%s121 + $0x7c] sm:$0xf]
        %v177 = vunpack.c.l.bf16 %v145
        %v178 = vunpack.c.l.bf16 %v146
        %v179 = vunpack.c.l.bf16 %v147
        %v180 = vunpack.c.l.bf16 %v148
        %v181 = vunpack.c.l.bf16 %v149
        %v182 = vunpack.c.l.bf16 %v150
        %v183 = vunpack.c.l.bf16 %v151
        %v184 = vunpack.c.l.bf16 %v152
        %v185 = vunpack.c.l.bf16 %v153
        %v186 = vunpack.c.l.bf16 %v154
        %v187 = vunpack.c.l.bf16 %v155
        %v188 = vunpack.c.l.bf16 %v156
        %v189 = vunpack.c.l.bf16 %v157
        %v190 = vunpack.c.l.bf16 %v158
        %v191 = vunpack.c.l.bf16 %v159
        %v192 = vunpack.c.l.bf16 %v160
        %v193 = vunpack.c.l.bf16 %v161
        %v194 = vunpack.c.l.bf16 %v162
        %v195 = vunpack.c.l.bf16 %v163
        %v196 = vunpack.c.l.bf16 %v164
        %v197 = vunpack.c.l.bf16 %v165
        %v198 = vunpack.c.l.bf16 %v166
        %v199 = vunpack.c.l.bf16 %v167
        %v200 = vunpack.c.l.bf16 %v168
        %v201 = vunpack.c.l.bf16 %v169
        %v202 = vunpack.c.l.bf16 %v170
        %v203 = vunpack.c.l.bf16 %v171
        %v204 = vunpack.c.l.bf16 %v172
        %v205 = vunpack.c.l.bf16 %v173
        %v206 = vunpack.c.l.bf16 %v174
        %v207 = vunpack.c.l.bf16 %v175
        %v208 = vunpack.c.l.bf16 %v176
        %v209 = vstv %s144
        %v210 = vmul.f32 %v177, %v209
        %v211 = vmul.f32 %v178, %v209
        %v212 = vmul.f32 %v179, %v209
        %v213 = vmul.f32 %v180, %v209
        %v214 = vmul.f32 %v181, %v209
        %v215 = vmul.f32 %v182, %v209
        %v216 = vmul.f32 %v183, %v209
        %v217 = vmul.f32 %v184, %v209
        %v218 = vmul.f32 %v185, %v209
        %v219 = vmul.f32 %v186, %v209
        %v220 = vmul.f32 %v187, %v209
        %v221 = vmul.f32 %v188, %v209
        %v222 = vmul.f32 %v189, %v209
        %v223 = vmul.f32 %v190, %v209
        %v224 = vmul.f32 %v191, %v209
        %v225 = vmul.f32 %v192, %v209
        %v226 = vmul.f32 %v193, %v209
        %v227 = vmul.f32 %v194, %v209
        %v228 = vmul.f32 %v195, %v209
        %v229 = vmul.f32 %v196, %v209
        %v230 = vmul.f32 %v197, %v209
        %v231 = vmul.f32 %v198, %v209
        %v232 = vmul.f32 %v199, %v209
        %v233 = vmul.f32 %v200, %v209
        %v234 = vmul.f32 %v201, %v209
        %v235 = vmul.f32 %v202, %v209
        %v236 = vmul.f32 %v203, %v209
        %v237 = vmul.f32 %v204, %v209
        %v238 = vmul.f32 %v205, %v209
        %v239 = vmul.f32 %v206, %v209
        %v240 = vmul.f32 %v207, %v209
        %v241 = vmul.f32 %v208, %v209
        %v242 = vround.ne.pseudo %v210
        %v243 = vround.ne.pseudo %v211
        %v244 = vround.ne.pseudo %v212
        %v245 = vround.ne.pseudo %v213
        %v246 = vround.ne.pseudo %v214
        %v247 = vround.ne.pseudo %v215
        %v248 = vround.ne.pseudo %v216
        %v249 = vround.ne.pseudo %v217
        %v250 = vround.ne.pseudo %v218
        %v251 = vround.ne.pseudo %v219
        %v252 = vround.ne.pseudo %v220
        %v253 = vround.ne.pseudo %v221
        %v254 = vround.ne.pseudo %v222
        %v255 = vround.ne.pseudo %v223
        %v256 = vround.ne.pseudo %v224
        %v257 = vround.ne.pseudo %v225
        %v258 = vround.ne.pseudo %v226
        %v259 = vround.ne.pseudo %v227
        %v260 = vround.ne.pseudo %v228
        %v261 = vround.ne.pseudo %v229
        %v262 = vround.ne.pseudo %v230
        %v263 = vround.ne.pseudo %v231
        %v264 = vround.ne.pseudo %v232
        %v265 = vround.ne.pseudo %v233
        %v266 = vround.ne.pseudo %v234
        %v267 = vround.ne.pseudo %v235
        %v268 = vround.ne.pseudo %v236
        %v269 = vround.ne.pseudo %v237
        %v270 = vround.ne.pseudo %v238
        %v271 = vround.ne.pseudo %v239
        %v272 = vround.ne.pseudo %v240
        %v273 = vround.ne.pseudo %v241
        %v274 = vstv %s143
        %v275 = vadd.f32 %v242, %v274
        %v276 = vadd.f32 %v243, %v274
        %v277 = vadd.f32 %v244, %v274
        %v278 = vadd.f32 %v245, %v274
        %v279 = vadd.f32 %v246, %v274
        %v280 = vadd.f32 %v247, %v274
        %v281 = vadd.f32 %v248, %v274
        %v282 = vadd.f32 %v249, %v274
        %v283 = vadd.f32 %v250, %v274
        %v284 = vadd.f32 %v251, %v274
        %v285 = vadd.f32 %v252, %v274
        %v286 = vadd.f32 %v253, %v274
        %v287 = vadd.f32 %v254, %v274
        %v288 = vadd.f32 %v255, %v274
        %v289 = vadd.f32 %v256, %v274
        %v290 = vadd.f32 %v257, %v274
        %v291 = vadd.f32 %v258, %v274
        %v292 = vadd.f32 %v259, %v274
        %v293 = vadd.f32 %v260, %v274
        %v294 = vadd.f32 %v261, %v274
        %v295 = vadd.f32 %v262, %v274
        %v296 = vadd.f32 %v263, %v274
        %v297 = vadd.f32 %v264, %v274
        %v298 = vadd.f32 %v265, %v274
        %v299 = vadd.f32 %v266, %v274
        %v300 = vadd.f32 %v267, %v274
        %v301 = vadd.f32 %v268, %v274
        %v302 = vadd.f32 %v269, %v274
        %v303 = vadd.f32 %v270, %v274
        %v304 = vadd.f32 %v271, %v274
        %v305 = vadd.f32 %v272, %v274
        %v306 = vadd.f32 %v273, %v274
        %v307 = vmax.f32 %v275, 0.0
        %v308 = vmax.f32 %v276, 0.0
        %v309 = vmax.f32 %v277, 0.0
        %v310 = vmax.f32 %v278, 0.0
        %v311 = vmax.f32 %v279, 0.0
        %v312 = vmax.f32 %v280, 0.0
        %v313 = vmax.f32 %v281, 0.0
        %v314 = vmax.f32 %v282, 0.0
        %v315 = vmax.f32 %v283, 0.0
        %v316 = vmax.f32 %v284, 0.0
        %v317 = vmax.f32 %v285, 0.0
        %v318 = vmax.f32 %v286, 0.0
        %v319 = vmax.f32 %v287, 0.0
        %v320 = vmax.f32 %v288, 0.0
        %v321 = vmax.f32 %v289, 0.0
        %v322 = vmax.f32 %v290, 0.0
        %v323 = vmax.f32 %v291, 0.0
        %v324 = vmax.f32 %v292, 0.0
        %v325 = vmax.f32 %v293, 0.0
        %v326 = vmax.f32 %v294, 0.0
        %v327 = vmax.f32 %v295, 0.0
        %v328 = vmax.f32 %v296, 0.0
        %v329 = vmax.f32 %v297, 0.0
        %v330 = vmax.f32 %v298, 0.0
        %v331 = vmax.f32 %v299, 0.0
        %v332 = vmax.f32 %v300, 0.0
        %v333 = vmax.f32 %v301, 0.0
        %v334 = vmax.f32 %v302, 0.0
        %v335 = vmax.f32 %v303, 0.0
        %v336 = vmax.f32 %v304, 0.0
        %v337 = vmax.f32 %v305, 0.0
        %v338 = vmax.f32 %v306, 0.0
        %v339 = vmin.f32 %v307, 255.0
        %v340 = vmin.f32 %v308, 255.0
        %v341 = vmin.f32 %v309, 255.0
        %v342 = vmin.f32 %v310, 255.0
        %v343 = vmin.f32 %v311, 255.0
        %v344 = vmin.f32 %v312, 255.0
        %v345 = vmin.f32 %v313, 255.0
        %v346 = vmin.f32 %v314, 255.0
        %v347 = vmin.f32 %v315, 255.0
        %v348 = vmin.f32 %v316, 255.0
        %v349 = vmin.f32 %v317, 255.0
        %v350 = vmin.f32 %v318, 255.0
        %v351 = vmin.f32 %v319, 255.0
        %v352 = vmin.f32 %v320, 255.0
        %v353 = vmin.f32 %v321, 255.0
        %v354 = vmin.f32 %v322, 255.0
        %v355 = vmin.f32 %v323, 255.0
        %v356 = vmin.f32 %v324, 255.0
        %v357 = vmin.f32 %v325, 255.0
        %v358 = vmin.f32 %v326, 255.0
        %v359 = vmin.f32 %v327, 255.0
        %v360 = vmin.f32 %v328, 255.0
        %v361 = vmin.f32 %v329, 255.0
        %v362 = vmin.f32 %v330, 255.0
        %v363 = vmin.f32 %v331, 255.0
        %v364 = vmin.f32 %v332, 255.0
        %v365 = vmin.f32 %v333, 255.0
        %v366 = vmin.f32 %v334, 255.0
        %v367 = vmin.f32 %v335, 255.0
        %v368 = vmin.f32 %v336, 255.0
        %v369 = vmin.f32 %v337, 255.0
        %v370 = vmin.f32 %v338, 255.0
        %v371 = vsub.f32 %v339, %v274
        %v372 = vsub.f32 %v340, %v274
        %v373 = vsub.f32 %v341, %v274
        %v374 = vsub.f32 %v342, %v274
        %v375 = vsub.f32 %v343, %v274
        %v376 = vsub.f32 %v344, %v274
        %v377 = vsub.f32 %v345, %v274
        %v378 = vsub.f32 %v346, %v274
        %v379 = vsub.f32 %v347, %v274
        %v380 = vsub.f32 %v348, %v274
        %v381 = vsub.f32 %v349, %v274
        %v382 = vsub.f32 %v350, %v274
        %v383 = vsub.f32 %v351, %v274
        %v384 = vsub.f32 %v352, %v274
        %v385 = vsub.f32 %v353, %v274
        %v386 = vsub.f32 %v354, %v274
        %v387 = vsub.f32 %v355, %v274
        %v388 = vsub.f32 %v356, %v274
        %v389 = vsub.f32 %v357, %v274
        %v390 = vsub.f32 %v358, %v274
        %v391 = vsub.f32 %v359, %v274
        %v392 = vsub.f32 %v360, %v274
        %v393 = vsub.f32 %v361, %v274
        %v394 = vsub.f32 %v362, %v274
        %v395 = vsub.f32 %v363, %v274
        %v396 = vsub.f32 %v364, %v274
        %v397 = vsub.f32 %v365, %v274
        %v398 = vsub.f32 %v366, %v274
        %v399 = vsub.f32 %v367, %v274
        %v400 = vsub.f32 %v368, %v274
        %v401 = vsub.f32 %v369, %v274
        %v402 = vsub.f32 %v370, %v274
        %v403 = vstv %s142
        %v404 = vmul.f32 %v371, %v403
        %v405 = vmul.f32 %v372, %v403
        %v406 = vmul.f32 %v373, %v403
        %v407 = vmul.f32 %v374, %v403
        %v408 = vmul.f32 %v375, %v403
        %v409 = vmul.f32 %v376, %v403
        %v410 = vmul.f32 %v377, %v403
        %v411 = vmul.f32 %v378, %v403
        %v412 = vmul.f32 %v379, %v403
        %v413 = vmul.f32 %v380, %v403
        %v414 = vmul.f32 %v381, %v403
        %v415 = vmul.f32 %v382, %v403
        %v416 = vmul.f32 %v383, %v403
        %v417 = vmul.f32 %v384, %v403
        %v418 = vmul.f32 %v385, %v403
        %v419 = vmul.f32 %v386, %v403
        %v420 = vmul.f32 %v387, %v403
        %v421 = vmul.f32 %v388, %v403
        %v422 = vmul.f32 %v389, %v403
        %v423 = vmul.f32 %v390, %v403
        %v424 = vmul.f32 %v391, %v403
        %v425 = vmul.f32 %v392, %v403
        %v426 = vmul.f32 %v393, %v403
        %v427 = vmul.f32 %v394, %v403
        %v428 = vmul.f32 %v395, %v403
        %v429 = vmul.f32 %v396, %v403
        %v430 = vmul.f32 %v397, %v403
        %v431 = vmul.f32 %v398, %v403
        %v432 = vmul.f32 %v399, %v403
        %v433 = vmul.f32 %v400, %v403
        %v434 = vmul.f32 %v401, %v403
        %v435 = vmul.f32 %v402, %v403
        %vm436 = vcmask 64512
        %437 = vst.msk [vmem:[%s139] sm:$0xff] %vm436, %v404
        %438 = vst.msk [vmem:[%s139 + $0x8] sm:$0xff] %vm436, %v405
        %439 = vst.msk [vmem:[%s139 + $0x10] sm:$0xff] %vm436, %v406
        %440 = vst.msk [vmem:[%s139 + $0x18] sm:$0xff] %vm436, %v407
        %441 = vst.msk [vmem:[%s139 + $0x20] sm:$0xff] %vm436, %v408
        %442 = vst.msk [vmem:[%s139 + $0x28] sm:$0xff] %vm436, %v409
        %443 = vst.msk [vmem:[%s139 + $0x30] sm:$0xff] %vm436, %v410
        %444 = vst.msk [vmem:[%s139 + $0x38] sm:$0xff] %vm436, %v411
        %445 = vst.msk [vmem:[%s139 + $0x40] sm:$0xff] %vm436, %v412
        %446 = vst.msk [vmem:[%s139 + $0x48] sm:$0xff] %vm436, %v413
        %447 = vst.msk [vmem:[%s139 + $0x50] sm:$0xff] %vm436, %v414
        %448 = vst.msk [vmem:[%s139 + $0x58] sm:$0xff] %vm436, %v415
        %449 = vst.msk [vmem:[%s139 + $0x60] sm:$0xff] %vm436, %v416
        %450 = vst.msk [vmem:[%s139 + $0x68] sm:$0xff] %vm436, %v417
        %451 = vst.msk [vmem:[%s139 + $0x70] sm:$0xff] %vm436, %v418
        %452 = vst.msk [vmem:[%s139 + $0x78] sm:$0xff] %vm436, %v419
        %453 = vst.msk [vmem:[%s139 + $0x80] sm:$0xff] %vm436, %v420
        %454 = vst.msk [vmem:[%s139 + $0x88] sm:$0xff] %vm436, %v421
        %455 = vst.msk [vmem:[%s139 + $0x90] sm:$0xff] %vm436, %v422
        %456 = vst.msk [vmem:[%s139 + $0x98] sm:$0xff] %vm436, %v423
        %457 = vst.msk [vmem:[%s139 + $0xa0] sm:$0xff] %vm436, %v424
        %458 = vst.msk [vmem:[%s139 + $0xa8] sm:$0xff] %vm436, %v425
        %459 = vst.msk [vmem:[%s139 + $0xb0] sm:$0xff] %vm436, %v426
        %460 = vst.msk [vmem:[%s139 + $0xb8] sm:$0xff] %vm436, %v427
        %461 = vst.msk [vmem:[%s139 + $0xc0] sm:$0xff] %vm436, %v428
        %462 = vst.msk [vmem:[%s139 + $0xc8] sm:$0xff] %vm436, %v429
        %463 = vst.msk [vmem:[%s139 + $0xd0] sm:$0xff] %vm436, %v430
        %464 = vst.msk [vmem:[%s139 + $0xd8] sm:$0xff] %vm436, %v431
        %465 = vst.msk [vmem:[%s139 + $0xe0] sm:$0xff] %vm436, %v432
        %466 = vst.msk [vmem:[%s139 + $0xe8] sm:$0xff] %vm436, %v433
        %467 = vst.msk [vmem:[%s139 + $0xf0] sm:$0xff] %vm436, %v434
        %468 = vst.msk [vmem:[%s139 + $0xf8] sm:$0xff] %vm436, %v435
        %s469 = sand.u32 %s57, 1
        %s470 = scalar_lea.sflag [#allocation6], %s469
        %s471 = sand.u32 %s57, 1
        %s472 = smul.addr %s471, 256
        %s473 = scalar_lea.vmem [#allocation7], %s472
        // Predicated region
        $region29: #{quant_module_forward.7} parent=23 // pred_check
          %p474 = pneg %p67
        $region30: #{quant_module_forward.7} parent=23 // pred_check_branch
          %476 = sbr.rel (%p474) target = $region32
        $region31: #{quant_module_forward.7} parent=23 // pred_region
          %s477 = smul.u32 32, %s23
          %s479 = ssub.s32 4096, 4096
          %480 = vsyncadd %s470, %s479
          %s481 = smul.addr %s477, 128
          %s482 = scalar_lea.hbm %s2, %s481
          %s483 = sshll.u32 %s473, 4
          %s484 = int_to_ptr.vmem [resolvable:$true] %s483
          %489 = dma.vmem_to_hbm [thread:$0]  %s484, 4096, %s482, %s470, 128, 128, 8
        $region32: #{quant_module_forward.7} parent=23 // pred_fallthru
          _
      $region24: #{quant_module_forward.7} parent=5 // pred_fallthru
        _
      %p490 = scmp.le.s32.totalorder 2, %s18
      // Predicated region
      $region33: #{quant_module_forward.7} parent=5 // pred_check
        %p491 = pneg %p490
      $region34: #{quant_module_forward.7} parent=5 // pred_check_branch
        %493 = sbr.rel (%p491) target = $region36
      $region35: #{quant_module_forward.7} parent=5 // pred_region
        %s494 = ssub.s32 %s18, 2
        // Predicated region
        $region37: #{quant_module_forward.7} parent=35 // pred_check
          %p495 = pneg %p73
        $region38: #{quant_module_forward.7} parent=35 // pred_check_branch
          %497 = sbr.rel (%p495) target = $region40
        $region39: #{quant_module_forward.7} parent=35 // pred_region
          %s498 = sand.u32 %s58, 1
          %s499 = scalar_lea.sflag [#allocation6], %s498
          %s500 = sand.u32 %s58, 1
          %s501 = smul.addr %s500, 256
          %s502 = scalar_lea.vmem [#allocation7], %s501
          %503 = dma.done %s499, 4096
        $region40: #{quant_module_forward.7} parent=35 // pred_fallthru
          _
      $region36: #{quant_module_forward.7} parent=5 // pred_fallthru
        _
    $region6: #{quant_module_forward.7} parent=1 // loop_footer
      %s22 = sadd.s32 1, %s18
    $region7: #{quant_module_forward.7} parent=1 // loop_footer_branch
      %17 = sbr.rel target = $region3
    $region8: #{quant_module_forward.7} parent=1 // loop_exit
      _
    %504 = vsyncpa [#allocation5], 1
    %s505 = scalar_lea.sflag [#allocation5], 1
    %506 = vsyncpa %s505, 1
    %507 = vsyncpa [#allocation6], 1
    %s508 = scalar_lea.sflag [#allocation6], 1
    %509 = vsyncpa %s508, 1

// kernel: quant_module_forward.6
$region0: #{quant_module_forward.6}
  #allocation0 [shape = 'u32[]', space=smem, size = 0x4, offset = 0x4, fixed_abs, tag = 'smem constant byte address 0x4 - core index']
  #allocation1 [shape = 'u32[144,128]{1,0:T(1,128)}', space=vmem, size = 0x12000, scoped, tag = 'internal scratch']
  %s0 = inlined_call_operand.hbm [shape: bf16[512,40], index: 0, kind: input, shape index: {}]
  %s1 = inlined_call_operand.hbm [shape: bf16[40,128], index: 1, kind: input, shape index: {}]
  %s2 = inlined_call_operand.hbm [shape: f32[1,128], index: 2, kind: input, shape index: {}]
  %s3 = inlined_call_operand.hbm [shape: bf16[512,128], index: 3, kind: output, shape index: {0}]
  %s4 = inlined_call_operand.hbm [shape: f32[16,128], index: 4, kind: output, shape index: {1}]
  %s5 = inlined_call_operand.hbm [shape: f32[16,128], index: 5, kind: output, shape index: {2}]
  %6 = xla_tuple %s3, %s4, %s5
  %s7 = sld [smem:[#allocation0]]
  $region73: #{quant_module_forward.6} parent=0
    _
  %s9 = ssub.s32 1, %s7
  %s10 = scalar_select 0, %s9, %s7
  $region1: #{quant_module_forward.6} parent=0
    #allocation2 [shape = 'u8[131072]{0}', space=vmem, size = 0x20000, scoped, tag = 'input window, operand 0']
    #allocation3 [shape = 's32[2]{0}', space=sflag, size = 0x8, scoped, tag = 'scoped memory for quant_module_forward.6']
    #allocation4 [shape = 's32[2]{0}', space=sflag, size = 0x8, scoped, tag = 'scoped memory for quant_module_forward.6']
    #allocation5 [shape = 'u8[10240]{0}', space=vmem, size = 0x2800, scoped, tag = 'input window, operand 1, single buffered']
    #allocation6 [shape = 's32[1]{0}', space=sflag, size = 0x4, scoped, tag = 'scoped memory for quant_module_forward.6']
    #allocation7 [shape = 'u8[512]{0}', space=vmem, size = 0x400, scoped, tag = 'input window, operand 2, single buffered']
    #allocation8 [shape = 'u8[131072]{0}', space=vmem, size = 0x20000, scoped, tag = 'output window, operand 0']
    #allocation9 [shape = 'u8[8192]{0}', space=vmem, size = 0x2000, scoped, tag = 'output window, operand 1']
    #allocation10 [shape = 's32[2]{0}', space=sflag, size = 0x8, scoped, tag = 'scoped memory for quant_module_forward.6']
    #allocation11 [shape = 'u8[8192]{0}', space=vmem, size = 0x2000, scoped, tag = 'output window, operand 2']
    %11 = vsyncpa [#allocation3], 0
    %s12 = scalar_lea.sflag [#allocation3], 1
    %13 = vsyncpa %s12, 0
    %14 = vsyncpa [#allocation6], 0
    %15 = vsyncpa [#allocation4], 0
    %s16 = scalar_lea.sflag [#allocation4], 1
    %17 = vsyncpa %s16, 0
    %18 = vsyncpa [#allocation10], 0
    %s19 = scalar_lea.sflag [#allocation10], 1
    %20 = vsyncpa %s19, 0
    loop: start=0, step=1, limit=4
    $region2: #{quant_module_forward.6} parent=1 // loop_pre_header
      _
    $region3: #{quant_module_forward.6} parent=1 // loop_header
      %s22 = sphi 0, %s26
      %p23 = scmp.ge.s32.totalorder %s22, 4
      %s29 = sphi 0, %s41
      %s30 = sphi 0, %s37
      %s31 = sphi 0, %s29
      %s32 = sphi 0, %s30
      %s33 = sphi 0, %s31
      %s34 = sphi 0, %s32
      %s44 = sphi 0, %s46
      %s47 = sphi 0, %s44
      %s48 = sphi 0, %s47
      %s64 = sphi 0, %s48
      %s70 = sphi 0, %s72
      %s73 = sphi 0, %s70
      %s74 = sphi 0, %s73
      %s90 = sphi 0, %s74
      %s96 = sphi 0, %s98
      %s99 = sphi 0, %s96
      %s100 = sphi 0, %s99
      %s116 = sphi 0, %s100
      %s124 = sphi 0, %s126
      %s127 = sphi 0, %s124
      %s128 = sphi 0, %s127
      %s144 = sphi 0, %s128
      %s152 = sphi 0, %s154
      %s155 = sphi 0, %s152
      %s156 = sphi 0, %s155
      %s172 = sphi 0, %s156
      %s180 = sphi 0, %s182
      %s183 = sphi 0, %s180
      %s184 = sphi 0, %s183
      %s200 = sphi 0, %s184
    $region4: #{quant_module_forward.6} parent=1 // loop_header_branch
      %25 = sbr.rel (%p23) target = $region8
    $region5: #{quant_module_forward.6} parent=1 // loop_body
      %s27 = ssub.s32 %s22, 1
      %s28 = ssub.s32 %s22, 2
      %s35 = sadd.s32 1, %s30
      %p36 = scmp.ge.s32.totalorder %s35, 1
      %s37 = scalar_select %p36, 0, %s35
      %s38 = sadd.s32 1, %s29
      %s39 = scalar_select %p36, %s38, %s29
      %p40 = scmp.ge.s32.totalorder %s39, 2
      %s41 = scalar_select %p40, 0, %s39
      %s42 = ssub.s32 %s29, %s41
      %p43 = scmp.eq.s32.totalorder %s42, 0
      %s45 = sadd.s32 %s44, 1
      %s46 = scalar_select %p43, %s44, %s45
      %p49 = pneg %p43
      %p50 = scmp.eq.s32.totalorder %s22, 1
      %p51 = por %p49, %p50
      %p52 = scmp.ne.s32.totalorder %s44, %s47
      %p53 = scmp.eq.s32.totalorder %s22, 0
      %p54 = por %p52, %p53
      %p55 = scmp.ne.s32.totalorder %s44, %s47
      %p56 = scmp.eq.s32.totalorder %s27, 1
      %p57 = por %p55, %p56
      %p58 = scmp.ne.s32.totalorder %s47, %s48
      %p59 = scmp.eq.s32.totalorder %s27, 0
      %p60 = por %p58, %p59
      %p61 = scmp.ne.s32.totalorder %s47, %s48
      %p62 = scmp.eq.s32.totalorder %s28, 1
      %p63 = por %p61, %p62
      %p65 = scmp.ne.s32.totalorder %s48, %s64
      %p66 = scmp.eq.s32.totalorder %s28, 0
      %p67 = por %p65, %p66
      %s68 = ssub.s32 %s30, %s37
      %p69 = scmp.eq.s32.totalorder %s68, 0
      %s71 = sadd.s32 %s70, 1
      %s72 = scalar_select %p69, %s70, %s71
      %p75 = pneg %p69
      %p76 = scmp.eq.s32.totalorder %s22, 1
      %p77 = por %p75, %p76
      %p78 = scmp.ne.s32.totalorder %s70, %s73
      %p79 = scmp.eq.s32.totalorder %s22, 0
      %p80 = por %p78, %p79
      %p81 = scmp.ne.s32.totalorder %s70, %s73
      %p82 = scmp.eq.s32.totalorder %s27, 1
      %p83 = por %p81, %p82
      %p84 = scmp.ne.s32.totalorder %s73, %s74
      %p85 = scmp.eq.s32.totalorder %s27, 0
      %p86 = por %p84, %p85
      %p87 = scmp.ne.s32.totalorder %s73, %s74
      %p88 = scmp.eq.s32.totalorder %s28, 1
      %p89 = por %p87, %p88
      %p91 = scmp.ne.s32.totalorder %s74, %s90
      %p92 = scmp.eq.s32.totalorder %s28, 0
      %p93 = por %p91, %p92
      %s94 = ssub.s32 %s30, %s37
      %p95 = scmp.eq.s32.totalorder %s94, 0
      %s97 = sadd.s32 %s96, 1
      %s98 = scalar_select %p95, %s96, %s97
      %p101 = pneg %p95
      %p102 = scmp.eq.s32.totalorder %s22, 1
      %p103 = por %p101, %p102
      %p104 = scmp.ne.s32.totalorder %s96, %s99
      %p105 = scmp.eq.s32.totalorder %s22, 0
      %p106 = por %p104, %p105
      %p107 = scmp.ne.s32.totalorder %s96, %s99
      %p108 = scmp.eq.s32.totalorder %s27, 1
      %p109 = por %p107, %p108
      %p110 = scmp.ne.s32.totalorder %s99, %s100
      %p111 = scmp.eq.s32.totalorder %s27, 0
      %p112 = por %p110, %p111
      %p113 = scmp.ne.s32.totalorder %s99, %s100
      %p114 = scmp.eq.s32.totalorder %s28, 1
      %p115 = por %p113, %p114
      %p117 = scmp.ne.s32.totalorder %s100, %s116
      %p118 = scmp.eq.s32.totalorder %s28, 0
      %p119 = por %p117, %p118
      %s120 = ssub.s32 %s29, %s41
      %s121 = ssub.s32 %s30, %s37
      %s122 = sor.u32 %s120, %s121
      %p123 = scmp.eq.s32.totalorder %s122, 0
      %s125 = sadd.s32 %s124, 1
      %s126 = scalar_select %p123, %s124, %s125
      %p129 = pneg %p123
      %p130 = scmp.eq.s32.totalorder %s22, 1
      %p131 = por %p129, %p130
      %p132 = scmp.ne.s32.totalorder %s124, %s127
      %p133 = scmp.eq.s32.totalorder %s22, 0
      %p134 = por %p132, %p133
      %p135 = scmp.ne.s32.totalorder %s124, %s127
      %p136 = scmp.eq.s32.totalorder %s27, 1
      %p137 = por %p135, %p136
      %p138 = scmp.ne.s32.totalorder %s127, %s128
      %p139 = scmp.eq.s32.totalorder %s27, 0
      %p140 = por %p138, %p139
      %p141 = scmp.ne.s32.totalorder %s127, %s128
      %p142 = scmp.eq.s32.totalorder %s28, 1
      %p143 = por %p141, %p142
      %p145 = scmp.ne.s32.totalorder %s128, %s144
      %p146 = scmp.eq.s32.totalorder %s28, 0
      %p147 = por %p145, %p146
      %s148 = ssub.s32 %s29, %s41
      %s149 = ssub.s32 %s30, %s37
      %s150 = sor.u32 %s148, %s149
      %p151 = scmp.eq.s32.totalorder %s150, 0
      %s153 = sadd.s32 %s152, 1
      %s154 = scalar_select %p151, %s152, %s153
      %p157 = pneg %p151
      %p158 = scmp.eq.s32.totalorder %s22, 1
      %p159 = por %p157, %p158
      %p160 = scmp.ne.s32.totalorder %s152, %s155
      %p161 = scmp.eq.s32.totalorder %s22, 0
      %p162 = por %p160, %p161
      %p163 = scmp.ne.s32.totalorder %s152, %s155
      %p164 = scmp.eq.s32.totalorder %s27, 1
      %p165 = por %p163, %p164
      %p166 = scmp.ne.s32.totalorder %s155, %s156
      %p167 = scmp.eq.s32.totalorder %s27, 0
      %p168 = por %p166, %p167
      %p169 = scmp.ne.s32.totalorder %s155, %s156
      %p170 = scmp.eq.s32.totalorder %s28, 1
      %p171 = por %p169, %p170
      %p173 = scmp.ne.s32.totalorder %s156, %s172
      %p174 = scmp.eq.s32.totalorder %s28, 0
      %p175 = por %p173, %p174
      %s176 = ssub.s32 %s29, %s41
      %s177 = ssub.s32 %s30, %s37
      %s178 = sor.u32 %s176, %s177
      %p179 = scmp.eq.s32.totalorder %s178, 0
      %s181 = sadd.s32 %s180, 1
      %s182 = scalar_select %p179, %s180, %s181
      %p185 = pneg %p179
      %p186 = scmp.eq.s32.totalorder %s22, 1
      %p187 = por %p185, %p186
      %p188 = scmp.ne.s32.totalorder %s180, %s183
      %p189 = scmp.eq.s32.totalorder %s22, 0
      %p190 = por %p188, %p189
      %p191 = scmp.ne.s32.totalorder %s180, %s183
      %p192 = scmp.eq.s32.totalorder %s27, 1
      %p193 = por %p191, %p192
      %p194 = scmp.ne.s32.totalorder %s183, %s184
      %p195 = scmp.eq.s32.totalorder %s27, 0
      %p196 = por %p194, %p195
      %p197 = scmp.ne.s32.totalorder %s183, %s184
      %p198 = scmp.eq.s32.totalorder %s28, 1
      %p199 = por %p197, %p198
      %p201 = scmp.ne.s32.totalorder %s184, %s200
      %p202 = scmp.eq.s32.totalorder %s28, 0
      %p203 = por %p201, %p202
      %p204 = scmp.le.s32.totalorder 1, %s22
      %p205 = scmp.lt.s32.totalorder %s22, 3
      %p206 = pnand %p204, %p205
      %p207 = pneg %p206
      // Predicated region
      $region9: #{quant_module_forward.6} parent=5 // pred_check
        _
      $region10: #{quant_module_forward.6} parent=5 // pred_check_branch
        %209 = sbr.rel (%p206) target = $region12
      $region11: #{quant_module_forward.6} parent=5 // pred_region
        %s210 = ssub.s32 %s22, 1
        // Predicated region
        $region13: #{quant_module_forward.6} parent=11 // pred_check
          %p211 = pneg %p86
        $region14: #{quant_module_forward.6} parent=11 // pred_check_branch
          %213 = sbr.rel (%p211) target = $region16
        $region15: #{quant_module_forward.6} parent=11 // pred_region
          %s215 = ssub.s32 320, 320
          %216 = vsyncadd [#allocation6], %s215
          %s217 = smul.addr %s32, 64
          %s218 = scalar_lea.hbm %s1, %s217
          %s219 = sshll.u32 [#allocation5], 4
          %s220 = int_to_ptr.vmem [resolvable:$true] %s219
          %225 = dma.hbm_to_vmem [thread:$0]  %s218, 320, %s220, [#allocation6], 64, 64, 4
        $region16: #{quant_module_forward.6} parent=11 // pred_fallthru
          _
        // Predicated region
        $region17: #{quant_module_forward.6} parent=11 // pred_check
          %p226 = pneg %p112
        $region18: #{quant_module_forward.6} parent=11 // pred_check_branch
          %228 = sbr.rel (%p226) target = $region20
        $region19: #{quant_module_forward.6} parent=11 // pred_region
          %s230 = ssub.s32 16, 16
          %231 = vsyncadd [#allocation6], %s230
          %s232 = smul.addr %s32, 16
          %s233 = scalar_lea.hbm %s2, %s232
          %s235 = sshll.u32 [#allocation7], 4
          %s236 = int_to_ptr.vmem [resolvable:$true] %s235
          %238 = dma.hbm_to_vmem [thread:$0]  %s233, 16, %s236, [#allocation6]
        $region20: #{quant_module_forward.6} parent=11 // pred_fallthru
          _
      $region12: #{quant_module_forward.6} parent=5 // pred_fallthru
        _
      %p239 = scmp.lt.s32.totalorder %s22, 2
      // Predicated region
      $region21: #{quant_module_forward.6} parent=5 // pred_check
        %p240 = pneg %p239
      $region22: #{quant_module_forward.6} parent=5 // pred_check_branch
        %242 = sbr.rel (%p240) target = $region24
      $region23: #{quant_module_forward.6} parent=5 // pred_region
        // Predicated region
        $region25: #{quant_module_forward.6} parent=23 // pred_check
          %p243 = pneg %p54
        $region26: #{quant_module_forward.6} parent=23 // pred_check_branch
          %245 = sbr.rel (%p243) target = $region28
        $region27: #{quant_module_forward.6} parent=23 // pred_region
          %s246 = sand.u32 %s44, 1
          %s247 = scalar_lea.sflag [#allocation3], %s246
          %s248 = sand.u32 %s44, 1
          %s249 = smul.addr %s248, 128
          %s250 = scalar_lea.vmem [#allocation2], %s249
          %s251 = smul.u32 32, %s29
          %s253 = ssub.s32 2048, 2048
          %254 = vsyncadd %s247, %s253
          %s255 = smul.addr %s251, 64
          %s256 = scalar_lea.hbm %s0, %s255
          %s257 = sshll.u32 %s250, 4
          %s258 = int_to_ptr.vmem [resolvable:$true] %s257
          %263 = dma.hbm_to_vmem [thread:$0]  %s256, 2048, %s258, %s247, 64, 64, 4
        $region28: #{quant_module_forward.6} parent=23 // pred_fallthru
          _
      $region24: #{quant_module_forward.6} parent=5 // pred_fallthru
        _
      %p264 = scmp.le.s32.totalorder 1, %s22
      %p265 = scmp.lt.s32.totalorder %s22, 3
      %p266 = pnand %p264, %p265
      %p267 = pneg %p266
      // Predicated region
      $region29: #{quant_module_forward.6} parent=5 // pred_check
        _
      $region30: #{quant_module_forward.6} parent=5 // pred_check_branch
        %269 = sbr.rel (%p266) target = $region32
      $region31: #{quant_module_forward.6} parent=5 // pred_region
        %s270 = ssub.s32 %s22, 1
        %s271 = sand.u32 %s47, 1
        %s272 = scalar_lea.sflag [#allocation3], %s271
        %s273 = sand.u32 %s47, 1
        %s274 = smul.addr %s273, 128
        %s275 = scalar_lea.vmem [#allocation2], %s274
        // Predicated region
        $region33: #{quant_module_forward.6} parent=31 // pred_check
          %p276 = pneg %p60
        $region34: #{quant_module_forward.6} parent=31 // pred_check_branch
          %278 = sbr.rel (%p276) target = $region36
        $region35: #{quant_module_forward.6} parent=31 // pred_region
          %279 = dma.done %s272, 2048
        $region36: #{quant_module_forward.6} parent=31 // pred_fallthru
          _
        // Predicated region
        $region37: #{quant_module_forward.6} parent=31 // pred_check
          %p280 = pneg %p86
        $region38: #{quant_module_forward.6} parent=31 // pred_check_branch
          %282 = sbr.rel (%p280) target = $region40
        $region39: #{quant_module_forward.6} parent=31 // pred_region
          %283 = dma.done [#allocation6], 320
        $region40: #{quant_module_forward.6} parent=31 // pred_fallthru
          _
        // Predicated region
        $region41: #{quant_module_forward.6} parent=31 // pred_check
          %p284 = pneg %p112
        $region42: #{quant_module_forward.6} parent=31 // pred_check_branch
          %286 = sbr.rel (%p284) target = $region44
        $region43: #{quant_module_forward.6} parent=31 // pred_region
          %287 = dma.done [#allocation6], 16
        $region44: #{quant_module_forward.6} parent=31 // pred_fallthru
          _
        %s288 = sand.u32 %s47, 1
        %s289 = scalar_lea.sflag [#allocation3], %s288
        %s290 = sand.u32 %s47, 1
        %s291 = smul.addr %s290, 128
        %s292 = scalar_lea.vmem [#allocation2], %s291
        %p293 = pneg %p60
        %p294 = pneg %p57
        %p295 = pneg %p86
        %p296 = pneg %p83
        %p297 = pneg %p112
        %p298 = pneg %p109
        %p299 = pneg %p140
        %p300 = pneg %p137
        %s301 = sand.u32 %s127, 1
        %s302 = scalar_lea.sflag [#allocation4], %s301
        %s303 = sand.u32 %s127, 1
        %s304 = smul.addr %s303, 128
        %s305 = scalar_lea.vmem [#allocation8], %s304
        %p306 = pneg %p168
        %p307 = pneg %p165
        %s308 = sand.u32 %s27, 1
        %s309 = scalar_lea.sflag [#allocation10], %s308
        %s310 = sand.u32 %s155, 1
        %s311 = smul.addr %s310, 8
        %s312 = scalar_lea.vmem [#allocation9], %s311
        %p313 = pneg %p196
        %p314 = pneg %p193
        %s315 = sand.u32 %s27, 1
        %s316 = scalar_lea.sflag [#allocation10], %s315
        %s317 = sand.u32 %s183, 1
        %s318 = smul.addr %s317, 8
        %s319 = scalar_lea.vmem [#allocation11], %s318
        %s320 = smul.u32 32, %s31
        %s321 = smul.u32 32, %s31
        %v323 = vld [vmem:[%s275] sm:$0xf]
        %v324 = vld [vmem:[%s275 + $0x4] sm:$0xf]
        %v325 = vld [vmem:[%s275 + $0x8] sm:$0xf]
        %v326 = vld [vmem:[%s275 + $0xc] sm:$0xf]
        %v327 = vld [vmem:[%s275 + $0x10] sm:$0xf]
        %v328 = vld [vmem:[%s275 + $0x14] sm:$0xf]
        %v329 = vld [vmem:[%s275 + $0x18] sm:$0xf]
        %v330 = vld [vmem:[%s275 + $0x1c] sm:$0xf]
        %v331 = vld [vmem:[%s275 + $0x20] sm:$0xf]
        %v332 = vld [vmem:[%s275 + $0x24] sm:$0xf]
        %v333 = vld [vmem:[%s275 + $0x28] sm:$0xf]
        %v334 = vld [vmem:[%s275 + $0x2c] sm:$0xf]
        %v335 = vld [vmem:[%s275 + $0x30] sm:$0xf]
        %v336 = vld [vmem:[%s275 + $0x34] sm:$0xf]
        %v337 = vld [vmem:[%s275 + $0x38] sm:$0xf]
        %v338 = vld [vmem:[%s275 + $0x3c] sm:$0xf]
        %v339 = vld [vmem:[%s275 + $0x40] sm:$0xf]
        %v340 = vld [vmem:[%s275 + $0x44] sm:$0xf]
        %v341 = vld [vmem:[%s275 + $0x48] sm:$0xf]
        %v342 = vld [vmem:[%s275 + $0x4c] sm:$0xf]
        %v343 = vld [vmem:[%s275 + $0x50] sm:$0xf]
        %v344 = vld [vmem:[%s275 + $0x54] sm:$0xf]
        %v345 = vld [vmem:[%s275 + $0x58] sm:$0xf]
        %v346 = vld [vmem:[%s275 + $0x5c] sm:$0xf]
        %v347 = vld [vmem:[%s275 + $0x60] sm:$0xf]
        %v348 = vld [vmem:[%s275 + $0x64] sm:$0xf]
        %v349 = vld [vmem:[%s275 + $0x68] sm:$0xf]
        %v350 = vld [vmem:[%s275 + $0x6c] sm:$0xf]
        %v351 = vld [vmem:[%s275 + $0x70] sm:$0xf]
        %v352 = vld [vmem:[%s275 + $0x74] sm:$0xf]
        %v353 = vld [vmem:[%s275 + $0x78] sm:$0xf]
        %v354 = vld [vmem:[%s275 + $0x7c] sm:$0xf]
        %v355 = vld [vmem:[#allocation5] sm:$0xf]
        %v356 = vld [vmem:[#allocation5 + $0x4] sm:$0xf]
        %v357 = vld [vmem:[#allocation5 + $0x8] sm:$0xf]
        %v358 = vld [vmem:[#allocation5 + $0xc] sm:$0xf]
        %v359 = vld [vmem:[#allocation5 + $0x10] sm:$0xf]
        %v360 = vld [vmem:[#allocation7] sm:$0x1]
        %v362 = vlaneseq
        %v363 = vshrl.u32 %v362, 7
        %v364 = vsub.s32 0, %v363
        %v365 = vrot.slane %v360, %v364
        %v399 = vunpack.c.l.b16 %v323
        %v400 = vunpack.c.l.b16 %v324
        %v401 = vunpack.c.l.b16 %v325
        %v402 = vunpack.c.l.b16 %v326
        %v403 = vunpack.c.l.b16 %v327
        %v404 = vunpack.c.l.b16 %v328
        %v405 = vunpack.c.l.b16 %v329
        %v406 = vunpack.c.l.b16 %v330
        %v407 = vunpack.c.l.b16 %v331
        %v408 = vunpack.c.l.b16 %v332
        %v409 = vunpack.c.l.b16 %v333
        %v410 = vunpack.c.l.b16 %v334
        %v411 = vunpack.c.l.b16 %v335
        %v412 = vunpack.c.l.b16 %v336
        %v413 = vunpack.c.l.b16 %v337
        %v414 = vunpack.c.l.b16 %v338
        %v415 = vunpack.c.l.b16 %v339
        %v416 = vunpack.c.l.b16 %v340
        %v417 = vunpack.c.l.b16 %v341
        %v418 = vunpack.c.l.b16 %v342
        %v419 = vunpack.c.l.b16 %v343
        %v420 = vunpack.c.l.b16 %v344
        %v421 = vunpack.c.l.b16 %v345
        %v422 = vunpack.c.l.b16 %v346
        %v423 = vunpack.c.l.b16 %v347
        %v424 = vunpack.c.l.b16 %v348
        %v425 = vunpack.c.l.b16 %v349
        %v426 = vunpack.c.l.b16 %v350
        %v427 = vunpack.c.l.b16 %v351
        %v428 = vunpack.c.l.b16 %v352
        %v429 = vunpack.c.l.b16 %v353
        %v430 = vunpack.c.l.b16 %v354
        %v431 = vpack.c.b16 %v400, %v399
        %v432 = vpack.c.b16 %v402, %v401
        %v433 = vpack.c.b16 %v404, %v403
        %v434 = vpack.c.b16 %v406, %v405
        %v435 = vpack.c.b16 %v408, %v407
        %v436 = vpack.c.b16 %v410, %v409
        %v437 = vpack.c.b16 %v412, %v411
        %v438 = vpack.c.b16 %v414, %v413
        %v439 = vpack.c.b16 %v416, %v415
        %v440 = vpack.c.b16 %v418, %v417
        %v441 = vpack.c.b16 %v420, %v419
        %v442 = vpack.c.b16 %v422, %v421
        %v443 = vpack.c.b16 %v424, %v423
        %v444 = vpack.c.b16 %v426, %v425
        %v445 = vpack.c.b16 %v428, %v427
        %v446 = vpack.c.b16 %v430, %v429
        %v452 = vunpack.c.l.b16 %v355
        %v453 = vunpack.c.l.b16 %v356
        %v454 = vunpack.c.l.b16 %v357
        %v455 = vunpack.c.l.b16 %v358
        %v456 = vunpack.c.l.b16 %v359
        %v457 = vpack.c.b16 %v453, %v452
        %v458 = vpack.c.b16 %v455, %v454
        %v459 = vpack.c.b16 %v456, %v456
        %vm462 = vcmask 326656
        %v464 = vsel %vm462, %v431, 0
        %v467 = vsel %vm462, %v432, 0
        %v470 = vsel %vm462, %v433, 0
        %v473 = vsel %vm462, %v434, 0
        %v476 = vsel %vm462, %v435, 0
        %v479 = vsel %vm462, %v436, 0
        %v482 = vsel %vm462, %v437, 0
        %v485 = vsel %vm462, %v438, 0
        %v488 = vsel %vm462, %v439, 0
        %v491 = vsel %vm462, %v440, 0
        %v494 = vsel %vm462, %v441, 0
        %v497 = vsel %vm462, %v442, 0
        %v500 = vsel %vm462, %v443, 0
        %v503 = vsel %vm462, %v444, 0
        %v506 = vsel %vm462, %v445, 0
        %v509 = vsel %vm462, %v446, 0
        %vm511 = vcmask 1043456
        %v513 = vsel %vm511, %v459, 0
        %515 = vmatprep.subr.bf16.mxu0 0
        %516 = vmatpush1.bf16.msra.mxu0 %v457
        %517 = vmatprep.subr.bf16.mxu0 0
        %518 = vmatpush1.bf16.msra.mxu0 %v458
        %519 = vmatprep.subr.bf16.mxu0 0
        %520 = vmatpush1.bf16.msra.mxu0 %v513
        %521 = vmatprep.subr.bf16.mxu0 0
        %522 = vmatpush1.bf16.msra.mxu0 0
        %523 = vmatprep.subr.bf16.mxu0 0
        %524 = vmatpush1.bf16.msra.mxu0 0
        %525 = vmatprep.subr.bf16.mxu0 0
        %526 = vmatpush1.bf16.msra.mxu0 0
        %527 = vmatprep.subr.bf16.mxu0 0
        %528 = vmatpush1.bf16.msra.mxu0 0
        %529 = vmatprep.subr.bf16.mxu0 0
        %530 = vmatpush1.bf16.msra.mxu0 0
        %531 = vmatprep.subr.bf16.mxu0 0
        %532 = vmatpush1.bf16.msra.mxu0 0
        %533 = vmatprep.subr.bf16.mxu0 0
        %534 = vmatpush1.bf16.msra.mxu0 0
        %535 = vmatprep.subr.bf16.mxu0 0
        %536 = vmatpush1.bf16.msra.mxu0 0
        %537 = vmatprep.subr.bf16.mxu0 0
        %538 = vmatpush1.bf16.msra.mxu0 0
        %539 = vmatprep.subr.bf16.mxu0 0
        %540 = vmatpush1.bf16.msra.mxu0 0
        %541 = vmatprep.subr.bf16.mxu0 0
        %542 = vmatpush1.bf16.msra.mxu0 0
        %543 = vmatprep.subr.bf16.mxu0 0
        %544 = vmatpush1.bf16.msra.mxu0 0
        %545 = vmatprep.subr.bf16.mxu0 0
        %546 = vmatpush1.bf16.msra.mxu0 0
        %547 = vmatprep.mubr.bf16.mxu0 0
        %548 = vmatmul.mubr.bf16.gmra.mrb[0].mxu0 %v464
        %v549 = vpop.f32.mrb[0].mxu0
        %v550 = vadd.f32 %v365, %v549
        %v551 = vpop.f32.mrb[0].mxu0
        %v552 = vpop.f32.mrb[0].mxu0
        %v553 = vadd.f32 %v365, %v552
        %v554 = vpop.f32.mrb[0].mxu0
        %555 = vmatprep.mubr.bf16.mxu0 0
        %556 = vmatmul.mubr.bf16.gmra.mrb[0].mxu0 %v467
        %v557 = vpop.f32.mrb[0].mxu0
        %v558 = vadd.f32 %v365, %v557
        %v559 = vpop.f32.mrb[0].mxu0
        %v560 = vpop.f32.mrb[0].mxu0
        %v561 = vadd.f32 %v365, %v560
        %v562 = vpop.f32.mrb[0].mxu0
        %563 = vmatprep.mubr.bf16.mxu0 0
        %564 = vmatmul.mubr.bf16.gmra.mrb[0].mxu0 %v470
        %v565 = vpop.f32.mrb[0].mxu0
        %v566 = vadd.f32 %v365, %v565
        %v567 = vpop.f32.mrb[0].mxu0
        %v568 = vpop.f32.mrb[0].mxu0
        %v569 = vadd.f32 %v365, %v568
        %v570 = vpop.f32.mrb[0].mxu0
        %571 = vmatprep.mubr.bf16.mxu0 0
        %572 = vmatmul.mubr.bf16.gmra.mrb[0].mxu0 %v473
        %v573 = vpop.f32.mrb[0].mxu0
        %v574 = vadd.f32 %v365, %v573
        %v575 = vpop.f32.mrb[0].mxu0
        %v576 = vpop.f32.mrb[0].mxu0
        %v577 = vadd.f32 %v365, %v576
        %v578 = vpop.f32.mrb[0].mxu0
        %579 = vmatprep.mubr.bf16.mxu0 0
        %580 = vmatmul.mubr.bf16.gmra.mrb[0].mxu0 %v476
        %v581 = vpop.f32.mrb[0].mxu0
        %v582 = vadd.f32 %v365, %v581
        %v583 = vpop.f32.mrb[0].mxu0
        %v584 = vpop.f32.mrb[0].mxu0
        %v585 = vadd.f32 %v365, %v584
        %v586 = vpop.f32.mrb[0].mxu0
        %587 = vmatprep.mubr.bf16.mxu0 0
        %588 = vmatmul.mubr.bf16.gmra.mrb[0].mxu0 %v479
        %v589 = vpop.f32.mrb[0].mxu0
        %v590 = vadd.f32 %v365, %v589
        %v591 = vpop.f32.mrb[0].mxu0
        %v592 = vpop.f32.mrb[0].mxu0
        %v593 = vadd.f32 %v365, %v592
        %v594 = vpop.f32.mrb[0].mxu0
        %595 = vmatprep.mubr.bf16.mxu0 0
        %596 = vmatmul.mubr.bf16.gmra.mrb[0].mxu0 %v482
        %v597 = vpop.f32.mrb[0].mxu0
        %v598 = vadd.f32 %v365, %v597
        %v599 = vpop.f32.mrb[0].mxu0
        %v600 = vpop.f32.mrb[0].mxu0
        %v601 = vadd.f32 %v365, %v600
        %v602 = vpop.f32.mrb[0].mxu0
        %603 = vmatprep.mubr.bf16.mxu0 0
        %604 = vmatmul.mubr.bf16.gmra.mrb[0].mxu0 %v485
        %v605 = vpop.f32.mrb[0].mxu0
        %v606 = vadd.f32 %v365, %v605
        %v607 = vpop.f32.mrb[0].mxu0
        %v608 = vpop.f32.mrb[0].mxu0
        %v609 = vadd.f32 %v365, %v608
        %v610 = vpop.f32.mrb[0].mxu0
        %611 = vmatprep.mubr.bf16.mxu0 0
        %612 = vmatmul.mubr.bf16.gmra.mrb[0].mxu0 %v488
        %v613 = vpop.f32.mrb[0].mxu0
        %v614 = vadd.f32 %v365, %v613
        %v615 = vpop.f32.mrb[0].mxu0
        %v616 = vpop.f32.mrb[0].mxu0
        %v617 = vadd.f32 %v365, %v616
        %v618 = vpop.f32.mrb[0].mxu0
        %619 = vmatprep.mubr.bf16.mxu0 0
        %620 = vmatmul.mubr.bf16.gmra.mrb[0].mxu0 %v491
        %v621 = vpop.f32.mrb[0].mxu0
        %v622 = vadd.f32 %v365, %v621
        %v623 = vpop.f32.mrb[0].mxu0
        %v624 = vpop.f32.mrb[0].mxu0
        %v625 = vadd.f32 %v365, %v624
        %v626 = vpop.f32.mrb[0].mxu0
        %627 = vmatprep.mubr.bf16.mxu0 0
        %628 = vmatmul.mubr.bf16.gmra.mrb[0].mxu0 %v494
        %v629 = vpop.f32.mrb[0].mxu0
        %v630 = vadd.f32 %v365, %v629
        %v631 = vpop.f32.mrb[0].mxu0
        %v632 = vpop.f32.mrb[0].mxu0
        %v633 = vadd.f32 %v365, %v632
        %v634 = vpop.f32.mrb[0].mxu0
        %635 = vmatprep.mubr.bf16.mxu0 0
        %636 = vmatmul.mubr.bf16.gmra.mrb[0].mxu0 %v497
        %v637 = vpop.f32.mrb[0].mxu0
        %v638 = vadd.f32 %v365, %v637
        %v639 = vpop.f32.mrb[0].mxu0
        %v640 = vpop.f32.mrb[0].mxu0
        %v641 = vadd.f32 %v365, %v640
        %v642 = vpop.f32.mrb[0].mxu0
        %643 = vmatprep.mubr.bf16.mxu0 0
        %644 = vmatmul.mubr.bf16.gmra.mrb[0].mxu0 %v500
        %v645 = vpop.f32.mrb[0].mxu0
        %v646 = vadd.f32 %v365, %v645
        %v647 = vpop.f32.mrb[0].mxu0
        %v648 = vpop.f32.mrb[0].mxu0
        %v649 = vadd.f32 %v365, %v648
        %v650 = vpop.f32.mrb[0].mxu0
        %651 = vmatprep.mubr.bf16.mxu0 0
        %652 = vmatmul.mubr.bf16.gmra.mrb[0].mxu0 %v503
        %v653 = vpop.f32.mrb[0].mxu0
        %v654 = vadd.f32 %v365, %v653
        %v655 = vpop.f32.mrb[0].mxu0
        %v656 = vpop.f32.mrb[0].mxu0
        %v657 = vadd.f32 %v365, %v656
        %v658 = vpop.f32.mrb[0].mxu0
        %659 = vmatprep.mubr.bf16.mxu0 0
        %660 = vmatmul.mubr.bf16.gmra.mrb[0].mxu0 %v506
        %v661 = vpop.f32.mrb[0].mxu0
        %v662 = vadd.f32 %v365, %v661
        %v663 = vpop.f32.mrb[0].mxu0
        %v664 = vpop.f32.mrb[0].mxu0
        %v665 = vadd.f32 %v365, %v664
        %v666 = vpop.f32.mrb[0].mxu0
        %667 = vmatprep.mubr.bf16.mxu0 0
        %668 = vmatmul.mubr.bf16.gmra.mrb[0].mxu0 %v509
        %v669 = vpop.f32.mrb[0].mxu0
        %v670 = vadd.f32 %v365, %v669
        %v671 = vpop.f32.mrb[0].mxu0
        %v672 = vpop.f32.mrb[0].mxu0
        %v673 = vadd.f32 %v365, %v672
        %v674 = vpop.f32.mrb[0].mxu0
        %675 = vdwg.mxu0
        %v676 = vpack.c.bf16 %v553, %v550
        %v677 = vpack.c.bf16 %v561, %v558
        %v678 = vpack.c.bf16 %v569, %v566
        %v679 = vpack.c.bf16 %v577, %v574
        %v680 = vpack.c.bf16 %v585, %v582
        %v681 = vpack.c.bf16 %v593, %v590
        %v682 = vpack.c.bf16 %v601, %v598
        %v683 = vpack.c.bf16 %v609, %v606
        %v684 = vpack.c.bf16 %v617, %v614
        %v685 = vpack.c.bf16 %v625, %v622
        %v686 = vpack.c.bf16 %v633, %v630
        %v687 = vpack.c.bf16 %v641, %v638
        %v688 = vpack.c.bf16 %v649, %v646
        %v689 = vpack.c.bf16 %v657, %v654
        %v690 = vpack.c.bf16 %v665, %v662
        %v691 = vpack.c.bf16 %v673, %v670
        %v708 = vunpack.c.l.b16 %v676
        %v709 = vunpack.c.h.b16 %v676
        %v710 = vunpack.c.l.b16 %v677
        %v711 = vunpack.c.h.b16 %v677
        %v712 = vunpack.c.l.b16 %v678
        %v713 = vunpack.c.h.b16 %v678
        %v714 = vunpack.c.l.b16 %v679
        %v715 = vunpack.c.h.b16 %v679
        %v716 = vunpack.c.l.b16 %v680
        %v717 = vunpack.c.h.b16 %v680
        %v718 = vunpack.c.l.b16 %v681
        %v719 = vunpack.c.h.b16 %v681
        %v720 = vunpack.c.l.b16 %v682
        %v721 = vunpack.c.h.b16 %v682
        %v722 = vunpack.c.l.b16 %v683
        %v723 = vunpack.c.h.b16 %v683
        %v724 = vunpack.c.l.b16 %v684
        %v725 = vunpack.c.h.b16 %v684
        %v726 = vunpack.c.l.b16 %v685
        %v727 = vunpack.c.h.b16 %v685
        %v728 = vunpack.c.l.b16 %v686
        %v729 = vunpack.c.h.b16 %v686
        %v730 = vunpack.c.l.b16 %v687
        %v731 = vunpack.c.h.b16 %v687
        %v732 = vunpack.c.l.b16 %v688
        %v733 = vunpack.c.h.b16 %v688
        %v734 = vunpack.c.l.b16 %v689
        %v735 = vunpack.c.h.b16 %v689
        %v736 = vunpack.c.l.b16 %v690
        %v737 = vunpack.c.h.b16 %v690
        %v738 = vunpack.c.l.b16 %v691
        %v739 = vunpack.c.h.b16 %v691
        %v740 = vpack.c.b16 %v708, %v708
        %v741 = vpack.c.b16 %v709, %v709
        %v742 = vpack.c.b16 %v710, %v710
        %v743 = vpack.c.b16 %v711, %v711
        %v744 = vpack.c.b16 %v712, %v712
        %v745 = vpack.c.b16 %v713, %v713
        %v746 = vpack.c.b16 %v714, %v714
        %v747 = vpack.c.b16 %v715, %v715
        %v748 = vpack.c.b16 %v716, %v716
        %v749 = vpack.c.b16 %v717, %v717
        %v750 = vpack.c.b16 %v718, %v718
        %v751 = vpack.c.b16 %v719, %v719
        %v752 = vpack.c.b16 %v720, %v720
        %v753 = vpack.c.b16 %v721, %v721
        %v754 = vpack.c.b16 %v722, %v722
        %v755 = vpack.c.b16 %v723, %v723
        %v756 = vpack.c.b16 %v724, %v724
        %v757 = vpack.c.b16 %v725, %v725
        %v758 = vpack.c.b16 %v726, %v726
        %v759 = vpack.c.b16 %v727, %v727
        %v760 = vpack.c.b16 %v728, %v728
        %v761 = vpack.c.b16 %v729, %v729
        %v762 = vpack.c.b16 %v730, %v730
        %v763 = vpack.c.b16 %v731, %v731
        %v764 = vpack.c.b16 %v732, %v732
        %v765 = vpack.c.b16 %v733, %v733
        %v766 = vpack.c.b16 %v734, %v734
        %v767 = vpack.c.b16 %v735, %v735
        %v768 = vpack.c.b16 %v736, %v736
        %v769 = vpack.c.b16 %v737, %v737
        %v770 = vpack.c.b16 %v738, %v738
        %v771 = vpack.c.b16 %v739, %v739
        %804 = vst [vmem:[%s305] sm:$0xf] %v740
        %805 = vst [vmem:[%s305 + $0x4] sm:$0xf] %v741
        %806 = vst [vmem:[%s305 + $0x8] sm:$0xf] %v742
        %807 = vst [vmem:[%s305 + $0xc] sm:$0xf] %v743
        %808 = vst [vmem:[%s305 + $0x10] sm:$0xf] %v744
        %809 = vst [vmem:[%s305 + $0x14] sm:$0xf] %v745
        %810 = vst [vmem:[%s305 + $0x18] sm:$0xf] %v746
        %811 = vst [vmem:[%s305 + $0x1c] sm:$0xf] %v747
        %812 = vst [vmem:[%s305 + $0x20] sm:$0xf] %v748
        %813 = vst [vmem:[%s305 + $0x24] sm:$0xf] %v749
        %814 = vst [vmem:[%s305 + $0x28] sm:$0xf] %v750
        %815 = vst [vmem:[%s305 + $0x2c] sm:$0xf] %v751
        %816 = vst [vmem:[%s305 + $0x30] sm:$0xf] %v752
        %817 = vst [vmem:[%s305 + $0x34] sm:$0xf] %v753
        %818 = vst [vmem:[%s305 + $0x38] sm:$0xf] %v754
        %819 = vst [vmem:[%s305 + $0x3c] sm:$0xf] %v755
        %820 = vst [vmem:[%s305 + $0x40] sm:$0xf] %v756
        %821 = vst [vmem:[%s305 + $0x44] sm:$0xf] %v757
        %822 = vst [vmem:[%s305 + $0x48] sm:$0xf] %v758
        %823 = vst [vmem:[%s305 + $0x4c] sm:$0xf] %v759
        %824 = vst [vmem:[%s305 + $0x50] sm:$0xf] %v760
        %825 = vst [vmem:[%s305 + $0x54] sm:$0xf] %v761
        %826 = vst [vmem:[%s305 + $0x58] sm:$0xf] %v762
        %827 = vst [vmem:[%s305 + $0x5c] sm:$0xf] %v763
        %828 = vst [vmem:[%s305 + $0x60] sm:$0xf] %v764
        %829 = vst [vmem:[%s305 + $0x64] sm:$0xf] %v765
        %830 = vst [vmem:[%s305 + $0x68] sm:$0xf] %v766
        %831 = vst [vmem:[%s305 + $0x6c] sm:$0xf] %v767
        %832 = vst [vmem:[%s305 + $0x70] sm:$0xf] %v768
        %833 = vst [vmem:[%s305 + $0x74] sm:$0xf] %v769
        %834 = vst [vmem:[%s305 + $0x78] sm:$0xf] %v770
        %835 = vst [vmem:[%s305 + $0x7c] sm:$0xf] %v771
        %v836 = vlaneseq
        %v837 = vshrl.u32 %v836, 7
        %v838 = vadd.s32 %v837, 8
        %v839 = vadd.s32 %v837, 16
        %v840 = vadd.s32 %v837, 24
        %v841 = vadd.s32 %v837, 32
        %v842 = vadd.s32 %v837, 40
        %v843 = vadd.s32 %v837, 48
        %v844 = vadd.s32 %v837, 56
        %v845 = vadd.s32 %v837, 64
        %v846 = vadd.s32 %v837, 72
        %v847 = vadd.s32 %v837, 80
        %v848 = vadd.s32 %v837, 88
        %v849 = vadd.s32 %v837, 96
        %v850 = vadd.s32 %v837, 104
        %v851 = vadd.s32 %v837, 112
        %v852 = vadd.s32 %v837, 120
        %v853 = vadd.s32 %v837, 128
        %v854 = vadd.s32 %v837, 136
        %v855 = vadd.s32 %v837, 144
        %v856 = vadd.s32 %v837, 152
        %v857 = vadd.s32 %v837, 160
        %v858 = vadd.s32 %v837, 168
        %v859 = vadd.s32 %v837, 176
        %v860 = vadd.s32 %v837, 184
        %v861 = vadd.s32 %v837, 192
        %v862 = vadd.s32 %v837, 200
        %v863 = vadd.s32 %v837, 208
        %v864 = vadd.s32 %v837, 216
        %v865 = vadd.s32 %v837, 224
        %v866 = vadd.s32 %v837, 232
        %v867 = vadd.s32 %v837, 240
        %v868 = vadd.s32 %v837, 248
        %s869 = smul.u32 %s31, 256
        %v870 = vstv %s869
        %v871 = vadd.s32 %v837, %v870
        %v872 = vadd.s32 %v838, %v870
        %v873 = vadd.s32 %v839, %v870
        %v874 = vadd.s32 %v840, %v870
        %v875 = vadd.s32 %v841, %v870
        %v876 = vadd.s32 %v842, %v870
        %v877 = vadd.s32 %v843, %v870
        %v878 = vadd.s32 %v844, %v870
        %v879 = vadd.s32 %v845, %v870
        %v880 = vadd.s32 %v846, %v870
        %v881 = vadd.s32 %v847, %v870
        %v882 = vadd.s32 %v848, %v870
        %v883 = vadd.s32 %v849, %v870
        %v884 = vadd.s32 %v850, %v870
        %v885 = vadd.s32 %v851, %v870
        %v886 = vadd.s32 %v852, %v870
        %v887 = vadd.s32 %v853, %v870
        %v888 = vadd.s32 %v854, %v870
        %v889 = vadd.s32 %v855, %v870
        %v890 = vadd.s32 %v856, %v870
        %v891 = vadd.s32 %v857, %v870
        %v892 = vadd.s32 %v858, %v870
        %v893 = vadd.s32 %v859, %v870
        %v894 = vadd.s32 %v860, %v870
        %v895 = vadd.s32 %v861, %v870
        %v896 = vadd.s32 %v862, %v870
        %v897 = vadd.s32 %v863, %v870
        %v898 = vadd.s32 %v864, %v870
        %v899 = vadd.s32 %v865, %v870
        %v900 = vadd.s32 %v866, %v870
        %v901 = vadd.s32 %v867, %v870
        %v902 = vadd.s32 %v868, %v870
        %v903 = vlaneseq
        %v904 = vand.u32 %v903, 127
        %s905 = smul.u32 %s32, 128
        %v906 = vstv %s905
        %v907 = vadd.s32 %v904, %v906
        %vm908 = vcmp.lt.s32.totalorder %v871, 392
        %vm909 = vcmp.lt.s32.totalorder %v872, 392
        %vm910 = vcmp.lt.s32.totalorder %v873, 392
        %vm911 = vcmp.lt.s32.totalorder %v874, 392
        %vm912 = vcmp.lt.s32.totalorder %v875, 392
        %vm913 = vcmp.lt.s32.totalorder %v876, 392
        %vm914 = vcmp.lt.s32.totalorder %v877, 392
        %vm915 = vcmp.lt.s32.totalorder %v878, 392
        %vm916 = vcmp.lt.s32.totalorder %v879, 392
        %vm917 = vcmp.lt.s32.totalorder %v880, 392
        %vm918 = vcmp.lt.s32.totalorder %v881, 392
        %vm919 = vcmp.lt.s32.totalorder %v882, 392
        %vm920 = vcmp.lt.s32.totalorder %v883, 392
        %vm921 = vcmp.lt.s32.totalorder %v884, 392
        %vm922 = vcmp.lt.s32.totalorder %v885, 392
        %vm923 = vcmp.lt.s32.totalorder %v886, 392
        %vm924 = vcmp.lt.s32.totalorder %v887, 392
        %vm925 = vcmp.lt.s32.totalorder %v888, 392
        %vm926 = vcmp.lt.s32.totalorder %v889, 392
        %vm927 = vcmp.lt.s32.totalorder %v890, 392
        %vm928 = vcmp.lt.s32.totalorder %v891, 392
        %vm929 = vcmp.lt.s32.totalorder %v892, 392
        %vm930 = vcmp.lt.s32.totalorder %v893, 392
        %vm931 = vcmp.lt.s32.totalorder %v894, 392
        %vm932 = vcmp.lt.s32.totalorder %v895, 392
        %vm933 = vcmp.lt.s32.totalorder %v896, 392
        %vm934 = vcmp.lt.s32.totalorder %v897, 392
        %vm935 = vcmp.lt.s32.totalorder %v898, 392
        %vm936 = vcmp.lt.s32.totalorder %v899, 392
        %vm937 = vcmp.lt.s32.totalorder %v900, 392
        %vm938 = vcmp.lt.s32.totalorder %v901, 392
        %vm939 = vcmp.lt.s32.totalorder %v902, 392
        %vm940 = vcmp.lt.s32.totalorder %v907, 8
        %vm941 = vmand %vm908, %vm940
        %vm942 = vmand %vm909, %vm940
        %vm943 = vmand %vm910, %vm940
        %vm944 = vmand %vm911, %vm940
        %vm945 = vmand %vm912, %vm940
        %vm946 = vmand %vm913, %vm940
        %vm947 = vmand %vm914, %vm940
        %vm948 = vmand %vm915, %vm940
        %vm949 = vmand %vm916, %vm940
        %vm950 = vmand %vm917, %vm940
        %vm951 = vmand %vm918, %vm940
        %vm952 = vmand %vm919, %vm940
        %vm953 = vmand %vm920, %vm940
        %vm954 = vmand %vm921, %vm940
        %vm955 = vmand %vm922, %vm940
        %vm956 = vmand %vm923, %vm940
        %vm957 = vmand %vm924, %vm940
        %vm958 = vmand %vm925, %vm940
        %vm959 = vmand %vm926, %vm940
        %vm960 = vmand %vm927, %vm940
        %vm961 = vmand %vm928, %vm940
        %vm962 = vmand %vm929, %vm940
        %vm963 = vmand %vm930, %vm940
        %vm964 = vmand %vm931, %vm940
        %vm965 = vmand %vm932, %vm940
        %vm966 = vmand %vm933, %vm940
        %vm967 = vmand %vm934, %vm940
        %vm968 = vmand %vm935, %vm940
        %vm969 = vmand %vm936, %vm940
        %vm970 = vmand %vm937, %vm940
        %vm971 = vmand %vm938, %vm940
        %vm972 = vmand %vm939, %vm940
        %v973 = vsel %vm941, %v550, 0.0
        %v974 = vsel %vm942, %v553, 0.0
        %v975 = vsel %vm943, %v558, 0.0
        %v976 = vsel %vm944, %v561, 0.0
        %v977 = vsel %vm945, %v566, 0.0
        %v978 = vsel %vm946, %v569, 0.0
        %v979 = vsel %vm947, %v574, 0.0
        %v980 = vsel %vm948, %v577, 0.0
        %v981 = vsel %vm949, %v582, 0.0
        %v982 = vsel %vm950, %v585, 0.0
        %v983 = vsel %vm951, %v590, 0.0
        %v984 = vsel %vm952, %v593, 0.0
        %v985 = vsel %vm953, %v598, 0.0
        %v986 = vsel %vm954, %v601, 0.0
        %v987 = vsel %vm955, %v606, 0.0
        %v988 = vsel %vm956, %v609, 0.0
        %v989 = vsel %vm957, %v614, 0.0
        %v990 = vsel %vm958, %v617, 0.0
        %v991 = vsel %vm959, %v622, 0.0
        %v992 = vsel %vm960, %v625, 0.0
        %v993 = vsel %vm961, %v630, 0.0
        %v994 = vsel %vm962, %v633, 0.0
        %v995 = vsel %vm963, %v638, 0.0
        %v996 = vsel %vm964, %v641, 0.0
        %v997 = vsel %vm965, %v646, 0.0
        %v998 = vsel %vm966, %v649, 0.0
        %v999 = vsel %vm967, %v654, 0.0
        %v1000 = vsel %vm968, %v657, 0.0
        %v1001 = vsel %vm969, %v662, 0.0
        %v1002 = vsel %vm970, %v665, 0.0
        %v1003 = vsel %vm971, %v670, 0.0
        %v1004 = vsel %vm972, %v673, 0.0
        %v1005 = vmin.f32 %v973, %v977
        %v1006 = vmin.f32 %v974, %v978
        %v1007 = vmin.f32 %v975, %v979
        %v1008 = vmin.f32 %v976, %v980
        %v1009 = vmin.f32 %v1005, %v981
        %v1010 = vmin.f32 %v1006, %v982
        %v1011 = vmin.f32 %v1007, %v983
        %v1012 = vmin.f32 %v1008, %v984
        %v1013 = vmin.f32 %v1009, %v985
        %v1014 = vmin.f32 %v1010, %v986
        %v1015 = vmin.f32 %v1011, %v987
        %v1016 = vmin.f32 %v1012, %v988
        %v1017 = vmin.f32 %v1013, %v989
        %v1018 = vmin.f32 %v1014, %v990
        %v1019 = vmin.f32 %v1015, %v991
        %v1020 = vmin.f32 %v1016, %v992
        %v1021 = vmin.f32 %v1017, %v993
        %v1022 = vmin.f32 %v1018, %v994
        %v1023 = vmin.f32 %v1019, %v995
        %v1024 = vmin.f32 %v1020, %v996
        %v1025 = vmin.f32 %v1021, %v997
        %v1026 = vmin.f32 %v1022, %v998
        %v1027 = vmin.f32 %v1023, %v999
        %v1028 = vmin.f32 %v1024, %v1000
        %v1029 = vmin.f32 %v1025, %v1001
        %v1030 = vmin.f32 %v1026, %v1002
        %v1031 = vmin.f32 %v1027, %v1003
        %v1032 = vmin.f32 %v1028, %v1004
        %v1033 = vmin.f32 %v1029, %v1030
        %v1034 = vmin.f32 %v1031, %v1032
        %v1035 = vmin.f32 %v1033, %v1034
        %1036 = vmin.xlane.f32.xlu0 %v1035
        %v1037 = vpop.xlane.xlu0 %1036
        %v1038 = vrot.slane %v1037, 4
        %v1039 = vmin.f32 %v1037, %v1038
        %v1040 = vrot.slane %v1039, 2
        %v1041 = vmin.f32 %v1039, %v1040
        %v1042 = vrot.slane %v1041, 1
        %v1043 = vmin.f32 %v1041, %v1042
        %s1044 = vtos %v1043
        %v1045 = vstv %s1044
        %1046 = vst [vmem:[%s312] sm:$0xff] %v1045
        %v1047 = vmax.f32 %v973, %v977
        %v1048 = vmax.f32 %v974, %v978
        %v1049 = vmax.f32 %v975, %v979
        %v1050 = vmax.f32 %v976, %v980
        %v1051 = vmax.f32 %v1047, %v981
        %v1052 = vmax.f32 %v1048, %v982
        %v1053 = vmax.f32 %v1049, %v983
        %v1054 = vmax.f32 %v1050, %v984
        %v1055 = vmax.f32 %v1051, %v985
        %v1056 = vmax.f32 %v1052, %v986
        %v1057 = vmax.f32 %v1053, %v987
        %v1058 = vmax.f32 %v1054, %v988
        %v1059 = vmax.f32 %v1055, %v989
        %v1060 = vmax.f32 %v1056, %v990
        %v1061 = vmax.f32 %v1057, %v991
        %v1062 = vmax.f32 %v1058, %v992
        %v1063 = vmax.f32 %v1059, %v993
        %v1064 = vmax.f32 %v1060, %v994
        %v1065 = vmax.f32 %v1061, %v995
        %v1066 = vmax.f32 %v1062, %v996
        %v1067 = vmax.f32 %v1063, %v997
        %v1068 = vmax.f32 %v1064, %v998
        %v1069 = vmax.f32 %v1065, %v999
        %v1070 = vmax.f32 %v1066, %v1000
        %v1071 = vmax.f32 %v1067, %v1001
        %v1072 = vmax.f32 %v1068, %v1002
        %v1073 = vmax.f32 %v1069, %v1003
        %v1074 = vmax.f32 %v1070, %v1004
        %v1075 = vmax.f32 %v1071, %v1072
        %v1076 = vmax.f32 %v1073, %v1074
        %v1077 = vmax.f32 %v1075, %v1076
        %1078 = vmax.xlane.f32.xlu0 %v1077
        %v1079 = vpop.xlane.xlu0 %1078
        %v1080 = vrot.slane %v1079, 4
        %v1081 = vmax.f32 %v1079, %v1080
        %v1082 = vrot.slane %v1081, 2
        %v1083 = vmax.f32 %v1081, %v1082
        %v1084 = vrot.slane %v1083, 1
        %v1085 = vmax.f32 %v1083, %v1084
        %s1086 = vtos %v1085
        %v1087 = vstv %s1086
        %1088 = vst [vmem:[%s319] sm:$0xff] %v1087
        %s1089 = sand.u32 %s127, 1
        %s1090 = scalar_lea.sflag [#allocation4], %s1089
        %s1091 = sand.u32 %s127, 1
        %s1092 = smul.addr %s1091, 128
        %s1093 = scalar_lea.vmem [#allocation8], %s1092
        %s1094 = sand.u32 %s27, 1
        %s1095 = scalar_lea.sflag [#allocation10], %s1094
        %s1096 = sand.u32 %s155, 1
        %s1097 = smul.addr %s1096, 8
        %s1098 = scalar_lea.vmem [#allocation9], %s1097
        %s1099 = sand.u32 %s27, 1
        %s1100 = scalar_lea.sflag [#allocation10], %s1099
        %s1101 = sand.u32 %s183, 1
        %s1102 = smul.addr %s1101, 8
        %s1103 = scalar_lea.vmem [#allocation11], %s1102
        // Predicated region
        $region45: #{quant_module_forward.6} parent=31 // pred_check
          %p1104 = pneg %p137
        $region46: #{quant_module_forward.6} parent=31 // pred_check_branch
          %1106 = sbr.rel (%p1104) target = $region48
        $region47: #{quant_module_forward.6} parent=31 // pred_region
          %s1107 = smul.u32 32, %s31
          %s1109 = ssub.s32 2048, 2048
          %1110 = vsyncadd %s1090, %s1109
          %s1111 = sadd.s32 %s32, %s1107
          %s1112 = smul.addr %s1111, 64
          %s1113 = scalar_lea.hbm %s3, %s1112
          %s1114 = sshll.u32 %s1093, 4
          %s1115 = int_to_ptr.vmem [resolvable:$true] %s1114
          %1120 = dma.vmem_to_hbm [thread:$0]  %s1115, 2048, %s1113, %s1090, 64, 64, 4
        $region48: #{quant_module_forward.6} parent=31 // pred_fallthru
          _
        // Predicated region
        $region49: #{quant_module_forward.6} parent=31 // pred_check
          %p1121 = pneg %p165
        $region50: #{quant_module_forward.6} parent=31 // pred_check_branch
          %1123 = sbr.rel (%p1121) target = $region52
        $region51: #{quant_module_forward.6} parent=31 // pred_region
          %s1125 = ssub.s32 128, 128
          %1126 = vsyncadd %s1095, %s1125
          %s1127 = sadd.s32 %s32, %s31
          %s1128 = smul.addr %s1127, 128
          %s1129 = scalar_lea.hbm %s4, %s1128
          %s1131 = sshll.u32 %s1098, 4
          %s1132 = int_to_ptr.vmem [resolvable:$true] %s1131
          %1134 = dma.vmem_to_hbm [thread:$0]  %s1132, 128, %s1129, %s1095
        $region52: #{quant_module_forward.6} parent=31 // pred_fallthru
          _
        // Predicated region
        $region53: #{quant_module_forward.6} parent=31 // pred_check
          %p1135 = pneg %p193
        $region54: #{quant_module_forward.6} parent=31 // pred_check_branch
          %1137 = sbr.rel (%p1135) target = $region56
        $region55: #{quant_module_forward.6} parent=31 // pred_region
          %s1139 = ssub.s32 128, 128
          %1140 = vsyncadd %s1100, %s1139
          %s1141 = sadd.s32 %s32, %s31
          %s1142 = smul.addr %s1141, 128
          %s1143 = scalar_lea.hbm %s5, %s1142
          %s1145 = sshll.u32 %s1103, 4
          %s1146 = int_to_ptr.vmem [resolvable:$true] %s1145
          %1148 = dma.vmem_to_hbm [thread:$0]  %s1146, 128, %s1143, %s1100
        $region56: #{quant_module_forward.6} parent=31 // pred_fallthru
          _
      $region32: #{quant_module_forward.6} parent=5 // pred_fallthru
        _
      %p1149 = scmp.le.s32.totalorder 2, %s22
      // Predicated region
      $region57: #{quant_module_forward.6} parent=5 // pred_check
        %p1150 = pneg %p1149
      $region58: #{quant_module_forward.6} parent=5 // pred_check_branch
        %1152 = sbr.rel (%p1150) target = $region60
      $region59: #{quant_module_forward.6} parent=5 // pred_region
        %s1153 = ssub.s32 %s22, 2
        // Predicated region
        $region61: #{quant_module_forward.6} parent=59 // pred_check
          %p1154 = pneg %p143
        $region62: #{quant_module_forward.6} parent=59 // pred_check_branch
          %1156 = sbr.rel (%p1154) target = $region64
        $region63: #{quant_module_forward.6} parent=59 // pred_region
          %s1157 = sand.u32 %s128, 1
          %s1158 = scalar_lea.sflag [#allocation4], %s1157
          %s1159 = sand.u32 %s128, 1
          %s1160 = smul.addr %s1159, 128
          %s1161 = scalar_lea.vmem [#allocation8], %s1160
          %1162 = dma.done %s1158, 2048
        $region64: #{quant_module_forward.6} parent=59 // pred_fallthru
          _
        // Predicated region
        $region65: #{quant_module_forward.6} parent=59 // pred_check
          %p1163 = pneg %p171
        $region66: #{quant_module_forward.6} parent=59 // pred_check_branch
          %1165 = sbr.rel (%p1163) target = $region68
        $region67: #{quant_module_forward.6} parent=59 // pred_region
          %s1166 = sand.u32 %s28, 1
          %s1167 = scalar_lea.sflag [#allocation10], %s1166
          %s1168 = sand.u32 %s156, 1
          %s1169 = smul.addr %s1168, 8
          %s1170 = scalar_lea.vmem [#allocation9], %s1169
          %1171 = dma.done %s1167, 128
        $region68: #{quant_module_forward.6} parent=59 // pred_fallthru
          _
        // Predicated region
        $region69: #{quant_module_forward.6} parent=59 // pred_check
          %p1172 = pneg %p199
        $region70: #{quant_module_forward.6} parent=59 // pred_check_branch
          %1174 = sbr.rel (%p1172) target = $region72
        $region71: #{quant_module_forward.6} parent=59 // pred_region
          %s1175 = sand.u32 %s28, 1
          %s1176 = scalar_lea.sflag [#allocation10], %s1175
          %s1177 = sand.u32 %s184, 1
          %s1178 = smul.addr %s1177, 8
          %s1179 = scalar_lea.vmem [#allocation11], %s1178
          %1180 = dma.done %s1176, 128
        $region72: #{quant_module_forward.6} parent=59 // pred_fallthru
          _
      $region60: #{quant_module_forward.6} parent=5 // pred_fallthru
        _
    $region6: #{quant_module_forward.6} parent=1 // loop_footer
      %s26 = sadd.s32 1, %s22
    $region7: #{quant_module_forward.6} parent=1 // loop_footer_branch
      %21 = sbr.rel target = $region3
    $region8: #{quant_module_forward.6} parent=1 // loop_exit
      _
    %1181 = vsyncpa [#allocation3], 1
    %s1182 = scalar_lea.sflag [#allocation3], 1
    %1183 = vsyncpa %s1182, 1
    %1184 = vsyncpa [#allocation6], 1
    %1185 = vsyncpa [#allocation4], 1
    %s1186 = scalar_lea.sflag [#allocation4], 1
    %1187 = vsyncpa %s1186, 1
    %1188 = vsyncpa [#allocation10], 1
    %s1189 = scalar_lea.sflag [#allocation10], 1
    %1190 = vsyncpa %s1189, 1

</llo_original>
